<compile_context>
chip_gen: v7x
topology: tpu7x:2x2x1
jax: 0.10.0
libtpu: 0.0.40
codegen_flags: <defaults>
</compile_context>

<pallas_src>
import math
import functools

import jax
import jax.numpy as jnp
from jax import lax
from jax.experimental import pallas as pl
from jax.experimental.pallas import tpu as pltpu


def _encoder_kernel(src_ref, pos_ref,
                    q_wT_ref, q_b_ref,
                    k_wT_ref, k_b_ref,
                    v_wT_ref, v_b_ref,
                    out_wT_ref, out_b_ref,
                    ln1_w_ref, ln1_b_ref,
                    lin1_wT_ref, lin1_b_ref,
                    lin2_wT_ref, lin2_b_ref,
                    ln2_w_ref, ln2_b_ref,
                    x_ref, att_ref,
                    *, num_heads, batch_block, seq):
    """One (batch_block, layer) grid step of the encoder.

    The layer axis carries the activations directly in x_ref (the f32 output
    block, resident across the layer axis): no extra VMEM scratch and no
    redundant per-layer store; it is flushed to HBM once per batch block.
    """
    H, S, BB = num_heads, seq, batch_block
    N, D = x_ref.shape                                    # N = BB * S
    hd = D // H

    layer = pl.program_id(1)

    # Seed the carried activations from src on the first layer only.
    @pl.when(layer == 0)
    def _():
        x_ref[...] = src_ref[...]

    x = x_ref[...]                                        # (N, D) f32 carry

    # q = k = with_pos_embed(src, pos); v = src.  pos arrives bf16 (half the
    # DMA / residency); the add promotes to f32, then bf16 feeds the MXU.
    qk_in = (x + pos_ref[...]).astype(jnp.bfloat16)
    v_in = x.astype(jnp.bfloat16)

    # Full-width (N, D) @ (D, D) projections, f32 accumulation.  The
    # 1/sqrt(hd) attention scale is already folded into q_wT / q_b (host).
    q = jnp.dot(qk_in, q_wT_ref[...], preferred_element_type=jnp.float32) + q_b_ref[...]
    k = jnp.dot(qk_in, k_wT_ref[...], preferred_element_type=jnp.float32) + k_b_ref[...]
    v = jnp.dot(v_in, v_wT_ref[...], preferred_element_type=jnp.float32) + v_b_ref[...]

    # Batch-major 3-D views (leading-dim-only reshape: the lane dim D is
    # untouched, so this is a free re-tiling when S % 8 == 0).
    q3 = q.astype(jnp.bfloat16).reshape(BB, S, D)
    k3 = k.astype(jnp.bfloat16).reshape(BB, S, D)
    v3 = v.astype(jnp.bfloat16).reshape(BB, S, D)

    # Attention: per head, ONE batched-over-batch einsum for scores and one
    # for context.  Softmax math stays in f32 and is normalized EXACTLY
    # because these probabilities are also the returned attention maps.
    att_acc = jnp.zeros((BB, S, S), jnp.float32)
    head_ctx = []
    for h in range(H):                                    # short static loop
        cs = slice(h * hd, (h + 1) * hd)
        s_h = jnp.einsum('bqd,bkd->bqk', q3[:, :, cs], k3[:, :, cs],
                         preferred_element_type=jnp.float32)      # (BB, S, S)
        s_h = s_h - jnp.max(s_h, axis=-1, keepdims=True)
        p = jnp.exp(s_h)
        p = p * pl.reciprocal(jnp.sum(p, axis=-1, keepdims=True), approx=False)
        att_acc = att_acc + p
        head_ctx.append(jnp.einsum('bqk,bkd->bqd', p.astype(jnp.bfloat16),
                                   v3[:, :, cs],
                                   preferred_element_type=jnp.float32))
    # One slab store per (layer, batch block) -- head-averaged
    # (nn.MultiheadAttention default).
    att_ref[...] = att_acc * (1.0 / H)

    # Head contexts lane-concatenated once -> out_proj is ONE K=D matmul.
    ctx = jnp.concatenate(head_ctx, axis=-1).reshape(N, D)
    attn_out = jnp.dot(ctx.astype(jnp.bfloat16), out_wT_ref[...],
                       preferred_element_type=jnp.float32) + out_b_ref[...]

    def layer_norm(z, w, b):
        mu = jnp.mean(z, axis=-1, keepdims=True)
        var = jnp.mean((z - mu) ** 2, axis=-1, keepdims=True)
        return (z - mu) * lax.rsqrt(var + 1e-5) * w + b

    # residual + LayerNorm1 (dropout = identity, inference semantics)
    x1 = layer_norm(x + attn_out, ln1_w_ref[...], ln1_b_ref[...])

    # FFN: linear1 -> ReLU -> linear2, residual, LayerNorm2
    h1 = jnp.maximum(
        jnp.dot(x1.astype(jnp.bfloat16), lin1_wT_ref[...],
                preferred_element_type=jnp.float32) + lin1_b_ref[...], 0.0)
    h2 = jnp.dot(h1.astype(jnp.bfloat16), lin2_wT_ref[...],
                 preferred_element_type=jnp.float32) + lin2_b_ref[...]

    # Write the carry: this IS the output block (resident across the layer
    # axis, flushed only when the batch block changes / grid ends).
    x_ref[...] = layer_norm(x1 + h2, ln2_w_ref[...], ln2_b_ref[...])


def prepare_encoder_params(layer_params, num_heads):
    """One-time host-side weight prep (hoisted out of the forward hot path):
    stack per-layer params, pre-transpose matmul weights to (in, out), split
    the in_proj into separate q/k/v stacks (no in-kernel lane slicing), fold
    the 1/sqrt(head_dim) scale into q, and cast matmul weights to bf16
    (f32 accumulation happens in-kernel).  Biases / LayerNorm stay f32."""
    L = len(layer_params)
    D = layer_params[0]["out_w"].shape[0]
    Fdim = layer_params[0]["lin1_w"].shape[0]
    assert D % num_heads == 0
    scale = 1.0 / math.sqrt(D // num_heads)
    bf16 = jnp.bfloat16

    def stack(name):
        return jnp.stack([jnp.asarray(p[name], jnp.float32) for p in layer_params])

    in_wT = jnp.transpose(stack("in_w"), (0, 2, 1))       # (L, D, 3D)
    in_b = stack("in_b").reshape(L, 1, 3 * D)
    return {
        "q_wT": (in_wT[:, :, 0:D] * scale).astype(bf16),
        "q_b": in_b[:, :, 0:D] * scale,
        "k_wT": in_wT[:, :, D:2 * D].astype(bf16),
        "k_b": in_b[:, :, D:2 * D],
        "v_wT": in_wT[:, :, 2 * D:3 * D].astype(bf16),
        "v_b": in_b[:, :, 2 * D:3 * D],
        "out_wT": jnp.transpose(stack("out_w"), (0, 2, 1)).astype(bf16),
        "out_b": stack("out_b").reshape(L, 1, D),
        "ln1_w": stack("ln1_w").reshape(L, 1, D),
        "ln1_b": stack("ln1_b").reshape(L, 1, D),
        "lin1_wT": jnp.transpose(stack("lin1_w"), (0, 2, 1)).astype(bf16),
        "lin1_b": stack("lin1_b").reshape(L, 1, Fdim),
        "lin2_wT": jnp.transpose(stack("lin2_w"), (0, 2, 1)).astype(bf16),
        "lin2_b": stack("lin2_b").reshape(L, 1, D),
        "ln2_w": stack("ln2_w").reshape(L, 1, D),
        "ln2_b": stack("ln2_b").reshape(L, 1, D),
    }


def transformer_encoder_forward(src_sbd, pos_sbd, prepped, num_heads,
                                norm_params=None, batch_block=None):
    """Mirrors TransformerEncoder.forward (mask / key_padding_mask = None).

    src_sbd, pos_sbd: (S, B, D).  `prepped` comes from prepare_encoder_params.
    Returns (output (S, B, D), {"self_attn": (L, B, S, S)})."""
    S, B, D = src_sbd.shape
    L = prepped["q_wT"].shape[0]
    Fdim = prepped["lin1_b"].shape[-1]
    if batch_block is None:
        batch_block = B
    assert B % batch_block == 0
    NB = B // batch_block
    Nblk = batch_block * S
    N = B * S

    # One-time (per forward, not per layer) relayout to batch-major rows.
    x = jnp.transpose(src_sbd, (1, 0, 2)).reshape(N, D).astype(jnp.float32)
    pos = jnp.transpose(pos_sbd, (1, 0, 2)).reshape(N, D).astype(jnp.bfloat16)

    def act_spec():                      # per batch block, resident across layers
        return pl.BlockSpec((Nblk, D), lambda nb, l: (nb, 0))

    def per_layer(shape):                # one layer's slab of an (L, ...) stack
        n = len(shape)
        return pl.BlockSpec((None,) + shape,
                            lambda nb, l, _n=n: (l,) + (0,) * _n)

    kernel = functools.partial(_encoder_kernel, num_heads=num_heads,
                               batch_block=batch_block, seq=S)

    out_flat, att = pl.pallas_call(
        kernel,
        out_shape=(jax.ShapeDtypeStruct((N, D), jnp.float32),
                   jax.ShapeDtypeStruct((L, B, S, S), jnp.float32)),
        grid=(NB, L),
        in_specs=[
            act_spec(), act_spec(),                            # src (layer 0 only), pos (bf16)
            per_layer((D, D)), per_layer((1, D)),              # q proj (scale folded)
            per_layer((D, D)), per_layer((1, D)),              # k proj
            per_layer((D, D)), per_layer((1, D)),              # v proj
            per_layer((D, D)), per_layer((1, D)),              # out proj
            per_layer((1, D)), per_layer((1, D)),              # LayerNorm1
            per_layer((D, Fdim)), per_layer((1, Fdim)),        # linear1
            per_layer((Fdim, D)), per_layer((1, D)),           # linear2
            per_layer((1, D)), per_layer((1, D)),              # LayerNorm2
        ],
        out_specs=(act_spec(),                                 # activation carry / final output
                   pl.BlockSpec((None, batch_block, S, S),
                                lambda nb, l: (l, nb, 0, 0))), # per-layer attention
        compiler_params=pltpu.CompilerParams(
            # batch blocks are independent -> "parallel" (2 TCs on v7x);
            # the layer axis is a sequential carry -> "arbitrary".
            dimension_semantics=("parallel", "arbitrary"),
            vmem_limit_bytes=64 * 1024 * 1024),
    )(x, pos,
      prepped["q_wT"], prepped["q_b"],
      prepped["k_wT"], prepped["k_b"],
      prepped["v_wT"], prepped["v_b"],
      prepped["out_wT"], prepped["out_b"],
      prepped["ln1_w"], prepped["ln1_b"],
      prepped["lin1_wT"], prepped["lin1_b"],
      prepped["lin2_wT"], prepped["lin2_b"],
      prepped["ln2_w"], prepped["ln2_b"])

    out = out_flat.reshape(B, S, D)
    stacked_atts = {"self_attn": att}                          # (L, B, S, S)
    if norm_params is not None:                                # module default: norm=None
        mu = jnp.mean(out, axis=-1, keepdims=True)
        var = jnp.mean((out - mu) ** 2, axis=-1, keepdims=True)
        out = (out - mu) * lax.rsqrt(var + 1e-5) * norm_params["w"] + norm_params["b"]
    return jnp.transpose(out, (1, 0, 2)), stacked_atts


def _init_layer_params(key, d_model, nhead, dim_feedforward):
    ks = jax.random.split(key, 6)
    scl = 0.05
    return {
        "in_w": scl * jax.random.normal(ks[0], (3 * d_model, d_model), jnp.float32),
        "in_b": scl * jax.random.normal(ks[1], (1, 3 * d_model), jnp.float32),
        "out_w": scl * jax.random.normal(ks[2], (d_model, d_model), jnp.float32),
        "out_b": jnp.zeros((1, d_model), jnp.float32),
        "ln1_w": jnp.ones((1, d_model), jnp.float32),
        "ln1_b": jnp.zeros((1, d_model), jnp.float32),
        "lin1_w": scl * jax.random.normal(ks[3], (dim_feedforward, d_model), jnp.float32),
        "lin1_b": scl * jax.random.normal(ks[4], (1, dim_feedforward), jnp.float32),
        "lin2_w": scl * jax.random.normal(ks[5], (d_model, dim_feedforward), jnp.float32),
        "lin2_b": jnp.zeros((1, d_model), jnp.float32),
        "ln2_w": jnp.ones((1, d_model), jnp.float32),
        "ln2_b": jnp.zeros((1, d_model), jnp.float32),
    }


if __name__ == "__main__":
    # Small shapes consistent with the module: seq=8, batch=2, d_model=32,
    # nhead=4, dim_feedforward=64, num_layers=2.
    S, B, D, H, F, L = 8, 2, 32, 4, 64, 2

    key = jax.random.PRNGKey(0)
    k_src, k_pos, k_par = jax.random.split(key, 3)
    src = jax.random.normal(k_src, (S, B, D), jnp.float32)
    pos = jax.random.normal(k_pos, (S, B, D), jnp.float32)

    layer_keys = jax.random.split(k_par, L)
    layer_params = [_init_layer_params(layer_keys[i], D, H, F) for i in range(L)]

    # One-time weight prep (hoisted out of the per-forward hot path).
    prepped = prepare_encoder_params(layer_params, num_heads=H)

    out, stacked_atts = transformer_encoder_forward(
        src, pos, prepped, num_heads=H, norm_params=None, batch_block=1)
    out = jax.block_until_ready(out)
    att = jax.block_until_ready(stacked_atts["self_attn"])

    assert out.shape == (S, B, D)
    assert att.shape == (L, B, S, S)
    assert bool(jnp.all(jnp.isfinite(out))) and bool(jnp.all(jnp.isfinite(att)))
    # attention rows sum to 1 (exact-reciprocal softmax normalization)
    assert bool(jnp.allclose(jnp.sum(att, axis=-1), 1.0, atol=1e-3))
    print("KERNEL_OK")
</pallas_src>

<mosaic_0001>
module attributes {stable_mosaic.version = 11 : i64} {
  func.func @_encoder_kernel(%arg0: i32, %arg1: i32, %arg2: memref<8x32xf32, #tpu.memory_space<vmem>>, %arg3: memref<8x32xbf16, #tpu.memory_space<vmem>>, %arg4: memref<1x32x32xbf16, #tpu.memory_space<vmem>>, %arg5: memref<1x1x32xf32, #tpu.memory_space<vmem>>, %arg6: memref<1x32x32xbf16, #tpu.memory_space<vmem>>, %arg7: memref<1x1x32xf32, #tpu.memory_space<vmem>>, %arg8: memref<1x32x32xbf16, #tpu.memory_space<vmem>>, %arg9: memref<1x1x32xf32, #tpu.memory_space<vmem>>, %arg10: memref<1x32x32xbf16, #tpu.memory_space<vmem>>, %arg11: memref<1x1x32xf32, #tpu.memory_space<vmem>>, %arg12: memref<1x1x32xf32, #tpu.memory_space<vmem>>, %arg13: memref<1x1x32xf32, #tpu.memory_space<vmem>>, %arg14: memref<1x32x64xbf16, #tpu.memory_space<vmem>>, %arg15: memref<1x1x64xf32, #tpu.memory_space<vmem>>, %arg16: memref<1x64x32xbf16, #tpu.memory_space<vmem>>, %arg17: memref<1x1x32xf32, #tpu.memory_space<vmem>>, %arg18: memref<1x1x32xf32, #tpu.memory_space<vmem>>, %arg19: memref<1x1x32xf32, #tpu.memory_space<vmem>>, %arg20: memref<8x32xf32, #tpu.memory_space<vmem>>, %arg21: memref<1x1x8x8xf32, #tpu.memory_space<vmem>>) attributes {dimension_semantics = [#tpu.dimension_semantics<parallel>, #tpu.dimension_semantics<arbitrary>], iteration_bounds = array<i64: 2, 2>, scalar_prefetch = 0 : i64, scratch_operands = 0 : i64, tpu.core_type = #tpu.core_type<tc>, window_params = [{transform_indices = @transform_0, window_bounds = array<i64: 8, 32>}, {transform_indices = @transform_1, window_bounds = array<i64: 8, 32>}, {transform_indices = @transform_2, window_bounds = array<i64: 1, 32, 32>}, {transform_indices = @transform_3, window_bounds = array<i64: 1, 1, 32>}, {transform_indices = @transform_4, window_bounds = array<i64: 1, 32, 32>}, {transform_indices = @transform_5, window_bounds = array<i64: 1, 1, 32>}, {transform_indices = @transform_6, window_bounds = array<i64: 1, 32, 32>}, {transform_indices = @transform_7, window_bounds = array<i64: 1, 1, 32>}, {transform_indices = @transform_8, window_bounds = array<i64: 1, 32, 32>}, {transform_indices = @transform_9, window_bounds = array<i64: 1, 1, 32>}, {transform_indices = @transform_10, window_bounds = array<i64: 1, 1, 32>}, {transform_indices = @transform_11, window_bounds = array<i64: 1, 1, 32>}, {transform_indices = @transform_12, window_bounds = array<i64: 1, 32, 64>}, {transform_indices = @transform_13, window_bounds = array<i64: 1, 1, 64>}, {transform_indices = @transform_14, window_bounds = array<i64: 1, 64, 32>}, {transform_indices = @transform_15, window_bounds = array<i64: 1, 1, 32>}, {transform_indices = @transform_16, window_bounds = array<i64: 1, 1, 32>}, {transform_indices = @transform_17, window_bounds = array<i64: 1, 1, 32>}, {transform_indices = @transform_18, window_bounds = array<i64: 8, 32>}, {transform_indices = @transform_19, window_bounds = array<i64: 1, 1, 8, 8>}]} {
    %c0_i32 = arith.constant 0 : i32
    %0 = arith.cmpi eq, %arg1, %c0_i32 : i32
    %1 = arith.extui %0 : i1 to i32
    %c0_i32_0 = arith.constant 0 : i32
    %2 = arith.cmpi ne, %1, %c0_i32_0 : i32
    scf.if %2 {
      %c0_92 = arith.constant 0 : index
      %c0_93 = arith.constant 0 : index
      %193 = vector.load %arg2[%c0_92, %c0_93] : memref<8x32xf32, #tpu.memory_space<vmem>>, vector<8x32xf32>
      %c0_94 = arith.constant 0 : index
      %c0_95 = arith.constant 0 : index
      %194 = vector.load %arg20[%c0_94, %c0_95] : memref<8x32xf32, #tpu.memory_space<vmem>>, vector<8x32xf32>
      tpu.vector_store %arg20[%c0_94, %c0_95], %193 {strides = array<i32>} : memref<8x32xf32, #tpu.memory_space<vmem>>, vector<8x32xf32>,
    } else {
    }
    %c0 = arith.constant 0 : index
    %c0_1 = arith.constant 0 : index
    %3 = vector.load %arg20[%c0, %c0_1] : memref<8x32xf32, #tpu.memory_space<vmem>>, vector<8x32xf32>
    %c0_2 = arith.constant 0 : index
    %c0_3 = arith.constant 0 : index
    %4 = vector.load %arg3[%c0_2, %c0_3] : memref<8x32xbf16, #tpu.memory_space<vmem>>, vector<8x32xbf16>
    %5 = arith.extf %4 : vector<8x32xbf16> to vector<8x32xf32>
    %6 = arith.addf %3, %5 : vector<8x32xf32>
    %7 = arith.truncf %6 : vector<8x32xf32> to vector<8x32xbf16>
    %8 = arith.truncf %3 : vector<8x32xf32> to vector<8x32xbf16>
    %c0_4 = arith.constant 0 : index
    %c0_5 = arith.constant 0 : index
    %c0_6 = arith.constant 0 : index
    %9 = vector.load %arg4[%c0_4, %c0_5, %c0_6] : memref<1x32x32xbf16, #tpu.memory_space<vmem>>, vector<1x32x32xbf16>
    %10 = vector.shape_cast %9 : vector<1x32x32xbf16> to vector<32x32xbf16>
    %cst = arith.constant dense<0.000000e+00> : vector<8x32xf32>
    %11 = tpu.matmul %7, %10, %cst {dimension_numbers = #tpu.dot_dimension_numbers<[1], [0], [0], [1], [0, 0, 1, 1], [], []>} : vector<8x32xbf16>, vector<32x32xbf16>, vector<8x32xf32> -> vector<8x32xf32>
    %c0_7 = arith.constant 0 : index
    %c0_8 = arith.constant 0 : index
    %c0_9 = arith.constant 0 : index
    %12 = vector.load %arg5[%c0_7, %c0_8, %c0_9] : memref<1x1x32xf32, #tpu.memory_space<vmem>>, vector<1x1x32xf32>
    %13 = vector.shape_cast %12 : vector<1x1x32xf32> to vector<1x32xf32>
    %14 = vector.broadcast %13 : vector<1x32xf32> to vector<8x32xf32>
    %15 = arith.addf %11, %14 : vector<8x32xf32>
    %c0_10 = arith.constant 0 : index
    %c0_11 = arith.constant 0 : index
    %c0_12 = arith.constant 0 : index
    %16 = vector.load %arg6[%c0_10, %c0_11, %c0_12] : memref<1x32x32xbf16, #tpu.memory_space<vmem>>, vector<1x32x32xbf16>
    %17 = vector.shape_cast %16 : vector<1x32x32xbf16> to vector<32x32xbf16>
    %cst_13 = arith.constant dense<0.000000e+00> : vector<8x32xf32>
    %18 = tpu.matmul %7, %17, %cst_13 {dimension_numbers = #tpu.dot_dimension_numbers<[1], [0], [0], [1], [0, 0, 1, 1], [], []>} : vector<8x32xbf16>, vector<32x32xbf16>, vector<8x32xf32> -> vector<8x32xf32>
    %c0_14 = arith.constant 0 : index
    %c0_15 = arith.constant 0 : index
    %c0_16 = arith.constant 0 : index
    %19 = vector.load %arg7[%c0_14, %c0_15, %c0_16] : memref<1x1x32xf32, #tpu.memory_space<vmem>>, vector<1x1x32xf32>
    %20 = vector.shape_cast %19 : vector<1x1x32xf32> to vector<1x32xf32>
    %21 = vector.broadcast %20 : vector<1x32xf32> to vector<8x32xf32>
    %22 = arith.addf %18, %21 : vector<8x32xf32>
    %c0_17 = arith.constant 0 : index
    %c0_18 = arith.constant 0 : index
    %c0_19 = arith.constant 0 : index
    %23 = vector.load %arg8[%c0_17, %c0_18, %c0_19] : memref<1x32x32xbf16, #tpu.memory_space<vmem>>, vector<1x32x32xbf16>
    %24 = vector.shape_cast %23 : vector<1x32x32xbf16> to vector<32x32xbf16>
    %cst_20 = arith.constant dense<0.000000e+00> : vector<8x32xf32>
    %25 = tpu.matmul %8, %24, %cst_20 {dimension_numbers = #tpu.dot_dimension_numbers<[1], [0], [0], [1], [0, 0, 1, 1], [], []>} : vector<8x32xbf16>, vector<32x32xbf16>, vector<8x32xf32> -> vector<8x32xf32>
    %c0_21 = arith.constant 0 : index
    %c0_22 = arith.constant 0 : index
    %c0_23 = arith.constant 0 : index
    %26 = vector.load %arg9[%c0_21, %c0_22, %c0_23] : memref<1x1x32xf32, #tpu.memory_space<vmem>>, vector<1x1x32xf32>
    %27 = vector.shape_cast %26 : vector<1x1x32xf32> to vector<1x32xf32>
    %28 = vector.broadcast %27 : vector<1x32xf32> to vector<8x32xf32>
    %29 = arith.addf %25, %28 : vector<8x32xf32>
    %30 = arith.truncf %15 : vector<8x32xf32> to vector<8x32xbf16>
    %31 = vector.shape_cast %30 : vector<8x32xbf16> to vector<1x8x32xbf16>
    %32 = arith.truncf %22 : vector<8x32xf32> to vector<8x32xbf16>
    %33 = vector.shape_cast %32 : vector<8x32xbf16> to vector<1x8x32xbf16>
    %34 = arith.truncf %29 : vector<8x32xf32> to vector<8x32xbf16>
    %35 = vector.shape_cast %34 : vector<8x32xbf16> to vector<1x8x32xbf16>
    %cst_24 = arith.constant 0.000000e+00 : f32
    %36 = vector.broadcast %cst_24 : f32 to vector<1x8x8xf32>
    %37 = vector.extract_strided_slice %31 {offsets = [0, 0, 0], sizes = [1, 8, 8], strides = [1, 1, 1]} : vector<1x8x32xbf16> to vector<1x8x8xbf16>
    %38 = vector.extract_strided_slice %33 {offsets = [0, 0, 0], sizes = [1, 8, 8], strides = [1, 1, 1]} : vector<1x8x32xbf16> to vector<1x8x8xbf16>
    "tpu.trace_start"() <{level = 10 : i32, message = "bqd,bkd->bqk"}> : () -> ()
    %cst_25 = arith.constant dense<0.000000e+00> : vector<1x8x8xf32>
    %39 = tpu.matmul %37, %38, %cst_25 {dimension_numbers = #tpu.dot_dimension_numbers<[2], [2], [1], [1], [0, 0, 0, 1, 1, 1], [0], [0]>} : vector<1x8x8xbf16>, vector<1x8x8xbf16>, vector<1x8x8xf32> -> vector<1x8x8xf32>
    "tpu.trace_stop"() : () -> ()
    %cst_26 = arith.constant dense<0xFF800000> : vector<1x8xf32>
    %40 = vector.multi_reduction <maximumf>, %39, %cst_26 [2] : vector<1x8x8xf32> to vector<1x8xf32>
    %41 = vector.shape_cast %40 : vector<1x8xf32> to vector<1x8x1xf32>
    %42 = vector.broadcast %41 : vector<1x8x1xf32> to vector<1x8x8xf32>
    %43 = arith.subf %39, %42 : vector<1x8x8xf32>
    %44 = math.exp %43 : vector<1x8x8xf32>
    %cst_27 = arith.constant dense<0.000000e+00> : vector<1x8xf32>
    %45 = vector.multi_reduction <add>, %44, %cst_27 [2] : vector<1x8x8xf32> to vector<1x8xf32>
    %46 = vector.shape_cast %45 : vector<1x8xf32> to vector<1x8x1xf32>
    %47 = tpu.reciprocal %46 : vector<1x8x1xf32> -> vector<1x8x1xf32>
    %48 = vector.broadcast %47 : vector<1x8x1xf32> to vector<1x8x8xf32>
    %49 = arith.mulf %44, %48 : vector<1x8x8xf32>
    %50 = arith.addf %36, %49 : vector<1x8x8xf32>
    %51 = arith.truncf %49 : vector<1x8x8xf32> to vector<1x8x8xbf16>
    %52 = vector.extract_strided_slice %35 {offsets = [0, 0, 0], sizes = [1, 8, 8], strides = [1, 1, 1]} : vector<1x8x32xbf16> to vector<1x8x8xbf16>
    "tpu.trace_start"() <{level = 10 : i32, message = "bqk,bkd->bqd"}> : () -> ()
    %cst_28 = arith.constant dense<0.000000e+00> : vector<1x8x8xf32>
    %53 = tpu.matmul %51, %52, %cst_28 {dimension_numbers = #tpu.dot_dimension_numbers<[2], [1], [1], [2], [0, 0, 0, 1, 1, 2], [0], [0]>} : vector<1x8x8xbf16>, vector<1x8x8xbf16>, vector<1x8x8xf32> -> vector<1x8x8xf32>
    "tpu.trace_stop"() : () -> ()
    %54 = vector.extract_strided_slice %31 {offsets = [0, 0, 8], sizes = [1, 8, 8], strides = [1, 1, 1]} : vector<1x8x32xbf16> to vector<1x8x8xbf16>
    %55 = vector.extract_strided_slice %33 {offsets = [0, 0, 8], sizes = [1, 8, 8], strides = [1, 1, 1]} : vector<1x8x32xbf16> to vector<1x8x8xbf16>
    "tpu.trace_start"() <{level = 10 : i32, message = "bqd,bkd->bqk"}> : () -> ()
    %cst_29 = arith.constant dense<0.000000e+00> : vector<1x8x8xf32>
    %56 = tpu.matmul %54, %55, %cst_29 {dimension_numbers = #tpu.dot_dimension_numbers<[2], [2], [1], [1], [0, 0, 0, 1, 1, 1], [0], [0]>} : vector<1x8x8xbf16>, vector<1x8x8xbf16>, vector<1x8x8xf32> -> vector<1x8x8xf32>
    "tpu.trace_stop"() : () -> ()
    %cst_30 = arith.constant dense<0xFF800000> : vector<1x8xf32>
    %57 = vector.multi_reduction <maximumf>, %56, %cst_30 [2] : vector<1x8x8xf32> to vector<1x8xf32>
    %58 = vector.shape_cast %57 : vector<1x8xf32> to vector<1x8x1xf32>
    %59 = vector.broadcast %58 : vector<1x8x1xf32> to vector<1x8x8xf32>
    %60 = arith.subf %56, %59 : vector<1x8x8xf32>
    %61 = math.exp %60 : vector<1x8x8xf32>
    %cst_31 = arith.constant dense<0.000000e+00> : vector<1x8xf32>
    %62 = vector.multi_reduction <add>, %61, %cst_31 [2] : vector<1x8x8xf32> to vector<1x8xf32>
    %63 = vector.shape_cast %62 : vector<1x8xf32> to vector<1x8x1xf32>
    %64 = tpu.reciprocal %63 : vector<1x8x1xf32> -> vector<1x8x1xf32>
    %65 = vector.broadcast %64 : vector<1x8x1xf32> to vector<1x8x8xf32>
    %66 = arith.mulf %61, %65 : vector<1x8x8xf32>
    %67 = arith.addf %50, %66 : vector<1x8x8xf32>
    %68 = arith.truncf %66 : vector<1x8x8xf32> to vector<1x8x8xbf16>
    %69 = vector.extract_strided_slice %35 {offsets = [0, 0, 8], sizes = [1, 8, 8], strides = [1, 1, 1]} : vector<1x8x32xbf16> to vector<1x8x8xbf16>
    "tpu.trace_start"() <{level = 10 : i32, message = "bqk,bkd->bqd"}> : () -> ()
    %cst_32 = arith.constant dense<0.000000e+00> : vector<1x8x8xf32>
    %70 = tpu.matmul %68, %69, %cst_32 {dimension_numbers = #tpu.dot_dimension_numbers<[2], [1], [1], [2], [0, 0, 0, 1, 1, 2], [0], [0]>} : vector<1x8x8xbf16>, vector<1x8x8xbf16>, vector<1x8x8xf32> -> vector<1x8x8xf32>
    "tpu.trace_stop"() : () -> ()
    %71 = vector.extract_strided_slice %31 {offsets = [0, 0, 16], sizes = [1, 8, 8], strides = [1, 1, 1]} : vector<1x8x32xbf16> to vector<1x8x8xbf16>
    %72 = vector.extract_strided_slice %33 {offsets = [0, 0, 16], sizes = [1, 8, 8], strides = [1, 1, 1]} : vector<1x8x32xbf16> to vector<1x8x8xbf16>
    "tpu.trace_start"() <{level = 10 : i32, message = "bqd,bkd->bqk"}> : () -> ()
    %cst_33 = arith.constant dense<0.000000e+00> : vector<1x8x8xf32>
    %73 = tpu.matmul %71, %72, %cst_33 {dimension_numbers = #tpu.dot_dimension_numbers<[2], [2], [1], [1], [0, 0, 0, 1, 1, 1], [0], [0]>} : vector<1x8x8xbf16>, vector<1x8x8xbf16>, vector<1x8x8xf32> -> vector<1x8x8xf32>
    "tpu.trace_stop"() : () -> ()
    %cst_34 = arith.constant dense<0xFF800000> : vector<1x8xf32>
    %74 = vector.multi_reduction <maximumf>, %73, %cst_34 [2] : vector<1x8x8xf32> to vector<1x8xf32>
    %75 = vector.shape_cast %74 : vector<1x8xf32> to vector<1x8x1xf32>
    %76 = vector.broadcast %75 : vector<1x8x1xf32> to vector<1x8x8xf32>
    %77 = arith.subf %73, %76 : vector<1x8x8xf32>
    %78 = math.exp %77 : vector<1x8x8xf32>
    %cst_35 = arith.constant dense<0.000000e+00> : vector<1x8xf32>
    %79 = vector.multi_reduction <add>, %78, %cst_35 [2] : vector<1x8x8xf32> to vector<1x8xf32>
    %80 = vector.shape_cast %79 : vector<1x8xf32> to vector<1x8x1xf32>
    %81 = tpu.reciprocal %80 : vector<1x8x1xf32> -> vector<1x8x1xf32>
    %82 = vector.broadcast %81 : vector<1x8x1xf32> to vector<1x8x8xf32>
    %83 = arith.mulf %78, %82 : vector<1x8x8xf32>
    %84 = arith.addf %67, %83 : vector<1x8x8xf32>
    %85 = arith.truncf %83 : vector<1x8x8xf32> to vector<1x8x8xbf16>
    %86 = vector.extract_strided_slice %35 {offsets = [0, 0, 16], sizes = [1, 8, 8], strides = [1, 1, 1]} : vector<1x8x32xbf16> to vector<1x8x8xbf16>
    "tpu.trace_start"() <{level = 10 : i32, message = "bqk,bkd->bqd"}> : () -> ()
    %cst_36 = arith.constant dense<0.000000e+00> : vector<1x8x8xf32>
    %87 = tpu.matmul %85, %86, %cst_36 {dimension_numbers = #tpu.dot_dimension_numbers<[2], [1], [1], [2], [0, 0, 0, 1, 1, 2], [0], [0]>} : vector<1x8x8xbf16>, vector<1x8x8xbf16>, vector<1x8x8xf32> -> vector<1x8x8xf32>
    "tpu.trace_stop"() : () -> ()
    %88 = vector.extract_strided_slice %31 {offsets = [0, 0, 24], sizes = [1, 8, 8], strides = [1, 1, 1]} : vector<1x8x32xbf16> to vector<1x8x8xbf16>
    %89 = vector.extract_strided_slice %33 {offsets = [0, 0, 24], sizes = [1, 8, 8], strides = [1, 1, 1]} : vector<1x8x32xbf16> to vector<1x8x8xbf16>
    "tpu.trace_start"() <{level = 10 : i32, message = "bqd,bkd->bqk"}> : () -> ()
    %cst_37 = arith.constant dense<0.000000e+00> : vector<1x8x8xf32>
    %90 = tpu.matmul %88, %89, %cst_37 {dimension_numbers = #tpu.dot_dimension_numbers<[2], [2], [1], [1], [0, 0, 0, 1, 1, 1], [0], [0]>} : vector<1x8x8xbf16>, vector<1x8x8xbf16>, vector<1x8x8xf32> -> vector<1x8x8xf32>
    "tpu.trace_stop"() : () -> ()
    %cst_38 = arith.constant dense<0xFF800000> : vector<1x8xf32>
    %91 = vector.multi_reduction <maximumf>, %90, %cst_38 [2] : vector<1x8x8xf32> to vector<1x8xf32>
    %92 = vector.shape_cast %91 : vector<1x8xf32> to vector<1x8x1xf32>
    %93 = vector.broadcast %92 : vector<1x8x1xf32> to vector<1x8x8xf32>
    %94 = arith.subf %90, %93 : vector<1x8x8xf32>
    %95 = math.exp %94 : vector<1x8x8xf32>
    %cst_39 = arith.constant dense<0.000000e+00> : vector<1x8xf32>
    %96 = vector.multi_reduction <add>, %95, %cst_39 [2] : vector<1x8x8xf32> to vector<1x8xf32>
    %97 = vector.shape_cast %96 : vector<1x8xf32> to vector<1x8x1xf32>
    %98 = tpu.reciprocal %97 : vector<1x8x1xf32> -> vector<1x8x1xf32>
    %99 = vector.broadcast %98 : vector<1x8x1xf32> to vector<1x8x8xf32>
    %100 = arith.mulf %95, %99 : vector<1x8x8xf32>
    %101 = arith.addf %84, %100 : vector<1x8x8xf32>
    %102 = arith.truncf %100 : vector<1x8x8xf32> to vector<1x8x8xbf16>
    %103 = vector.extract_strided_slice %35 {offsets = [0, 0, 24], sizes = [1, 8, 8], strides = [1, 1, 1]} : vector<1x8x32xbf16> to vector<1x8x8xbf16>
    "tpu.trace_start"() <{level = 10 : i32, message = "bqk,bkd->bqd"}> : () -> ()
    %cst_40 = arith.constant dense<0.000000e+00> : vector<1x8x8xf32>
    %104 = tpu.matmul %102, %103, %cst_40 {dimension_numbers = #tpu.dot_dimension_numbers<[2], [1], [1], [2], [0, 0, 0, 1, 1, 2], [0], [0]>} : vector<1x8x8xbf16>, vector<1x8x8xbf16>, vector<1x8x8xf32> -> vector<1x8x8xf32>
    "tpu.trace_stop"() : () -> ()
    %cst_41 = arith.constant 2.500000e-01 : f32
    %105 = vector.broadcast %cst_41 : f32 to vector<1x8x8xf32>
    %106 = arith.mulf %101, %105 : vector<1x8x8xf32>
    %c0_42 = arith.constant 0 : index
    %c0_43 = arith.constant 0 : index
    %c0_44 = arith.constant 0 : index
    %c0_45 = arith.constant 0 : index
    %107 = vector.load %arg21[%c0_42, %c0_43, %c0_44, %c0_45] : memref<1x1x8x8xf32, #tpu.memory_space<vmem>>, vector<1x1x8x8xf32>
    %108 = vector.shape_cast %107 : vector<1x1x8x8xf32> to vector<1x8x8xf32>
    %109 = vector.shape_cast %106 : vector<1x8x8xf32> to vector<1x1x8x8xf32>
    tpu.vector_store %arg21[%c0_42, %c0_43, %c0_44, %c0_45], %109 {strides = array<i32>} : memref<1x1x8x8xf32, #tpu.memory_space<vmem>>, vector<1x1x8x8xf32>,
    %110 = tpu.concatenate %53, %70, %87, %104 in 2 : vector<1x8x8xf32>, vector<1x8x8xf32>, vector<1x8x8xf32>, vector<1x8x8xf32> -> vector<1x8x32xf32>
    %111 = vector.shape_cast %110 : vector<1x8x32xf32> to vector<8x32xf32>
    %112 = arith.truncf %111 : vector<8x32xf32> to vector<8x32xbf16>
    %c0_46 = arith.constant 0 : index
    %c0_47 = arith.constant 0 : index
    %c0_48 = arith.constant 0 : index
    %113 = vector.load %arg10[%c0_46, %c0_47, %c0_48] : memref<1x32x32xbf16, #tpu.memory_space<vmem>>, vector<1x32x32xbf16>
    %114 = vector.shape_cast %113 : vector<1x32x32xbf16> to vector<32x32xbf16>
    %cst_49 = arith.constant dense<0.000000e+00> : vector<8x32xf32>
    %115 = tpu.matmul %112, %114, %cst_49 {dimension_numbers = #tpu.dot_dimension_numbers<[1], [0], [0], [1], [0, 0, 1, 1], [], []>} : vector<8x32xbf16>, vector<32x32xbf16>, vector<8x32xf32> -> vector<8x32xf32>
    %c0_50 = arith.constant 0 : index
    %c0_51 = arith.constant 0 : index
    %c0_52 = arith.constant 0 : index
    %116 = vector.load %arg11[%c0_50, %c0_51, %c0_52] : memref<1x1x32xf32, #tpu.memory_space<vmem>>, vector<1x1x32xf32>
    %117 = vector.shape_cast %116 : vector<1x1x32xf32> to vector<1x32xf32>
    %118 = vector.broadcast %117 : vector<1x32xf32> to vector<8x32xf32>
    %119 = arith.addf %115, %118 : vector<8x32xf32>
    %120 = arith.addf %3, %119 : vector<8x32xf32>
    %c0_53 = arith.constant 0 : index
    %c0_54 = arith.constant 0 : index
    %c0_55 = arith.constant 0 : index
    %121 = vector.load %arg12[%c0_53, %c0_54, %c0_55] : memref<1x1x32xf32, #tpu.memory_space<vmem>>, vector<1x1x32xf32>
    %122 = vector.shape_cast %121 : vector<1x1x32xf32> to vector<1x32xf32>
    %c0_56 = arith.constant 0 : index
    %c0_57 = arith.constant 0 : index
    %c0_58 = arith.constant 0 : index
    %123 = vector.load %arg13[%c0_56, %c0_57, %c0_58] : memref<1x1x32xf32, #tpu.memory_space<vmem>>, vector<1x1x32xf32>
    %124 = vector.shape_cast %123 : vector<1x1x32xf32> to vector<1x32xf32>
    %cst_59 = arith.constant dense<0.000000e+00> : vector<8xf32>
    %125 = vector.multi_reduction <add>, %120, %cst_59 [1] : vector<8x32xf32> to vector<8xf32>
    %126 = vector.shape_cast %125 : vector<8xf32> to vector<8x1xf32>
    %cst_60 = arith.constant 3.200000e+01 : f32
    %127 = vector.broadcast %cst_60 : f32 to vector<8x1xf32>
    %128 = arith.divf %126, %127 : vector<8x1xf32>
    %129 = vector.broadcast %128 : vector<8x1xf32> to vector<8x32xf32>
    %130 = arith.subf %120, %129 : vector<8x32xf32>
    %131 = arith.mulf %130, %130 : vector<8x32xf32>
    %cst_61 = arith.constant dense<0.000000e+00> : vector<8xf32>
    %132 = vector.multi_reduction <add>, %131, %cst_61 [1] : vector<8x32xf32> to vector<8xf32>
    %133 = vector.shape_cast %132 : vector<8xf32> to vector<8x1xf32>
    %cst_62 = arith.constant 3.200000e+01 : f32
    %134 = vector.broadcast %cst_62 : f32 to vector<8x1xf32>
    %135 = arith.divf %133, %134 : vector<8x1xf32>
    %136 = vector.broadcast %128 : vector<8x1xf32> to vector<8x32xf32>
    %137 = arith.subf %120, %136 : vector<8x32xf32>
    %cst_63 = arith.constant 9.99999974E-6 : f32
    %138 = vector.broadcast %cst_63 : f32 to vector<8x1xf32>
    %139 = arith.addf %135, %138 : vector<8x1xf32>
    %140 = math.rsqrt %139 : vector<8x1xf32>
    %141 = vector.broadcast %140 : vector<8x1xf32> to vector<8x32xf32>
    %142 = arith.mulf %137, %141 : vector<8x32xf32>
    %143 = vector.broadcast %122 : vector<1x32xf32> to vector<8x32xf32>
    %144 = arith.mulf %142, %143 : vector<8x32xf32>
    %145 = vector.broadcast %124 : vector<1x32xf32> to vector<8x32xf32>
    %146 = arith.addf %144, %145 : vector<8x32xf32>
    %147 = arith.truncf %146 : vector<8x32xf32> to vector<8x32xbf16>
    %c0_64 = arith.constant 0 : index
    %c0_65 = arith.constant 0 : index
    %c0_66 = arith.constant 0 : index
    %148 = vector.load %arg14[%c0_64, %c0_65, %c0_66] : memref<1x32x64xbf16, #tpu.memory_space<vmem>>, vector<1x32x64xbf16>
    %149 = vector.shape_cast %148 : vector<1x32x64xbf16> to vector<32x64xbf16>
    %cst_67 = arith.constant dense<0.000000e+00> : vector<8x64xf32>
    %150 = tpu.matmul %147, %149, %cst_67 {dimension_numbers = #tpu.dot_dimension_numbers<[1], [0], [0], [1], [0, 0, 1, 1], [], []>} : vector<8x32xbf16>, vector<32x64xbf16>, vector<8x64xf32> -> vector<8x64xf32>
    %c0_68 = arith.constant 0 : index
    %c0_69 = arith.constant 0 : index
    %c0_70 = arith.constant 0 : index
    %151 = vector.load %arg15[%c0_68, %c0_69, %c0_70] : memref<1x1x64xf32, #tpu.memory_space<vmem>>, vector<1x1x64xf32>
    %152 = vector.shape_cast %151 : vector<1x1x64xf32> to vector<1x64xf32>
    %153 = vector.broadcast %152 : vector<1x64xf32> to vector<8x64xf32>
    %154 = arith.addf %150, %153 : vector<8x64xf32>
    %cst_71 = arith.constant 0.000000e+00 : f32
    %155 = vector.broadcast %cst_71 : f32 to vector<8x64xf32>
    %156 = arith.maximumf %154, %155 : vector<8x64xf32>
    %157 = arith.truncf %156 : vector<8x64xf32> to vector<8x64xbf16>
    %c0_72 = arith.constant 0 : index
    %c0_73 = arith.constant 0 : index
    %c0_74 = arith.constant 0 : index
    %158 = vector.load %arg16[%c0_72, %c0_73, %c0_74] : memref<1x64x32xbf16, #tpu.memory_space<vmem>>, vector<1x64x32xbf16>
    %159 = vector.shape_cast %158 : vector<1x64x32xbf16> to vector<64x32xbf16>
    %cst_75 = arith.constant dense<0.000000e+00> : vector<8x32xf32>
    %160 = tpu.matmul %157, %159, %cst_75 {dimension_numbers = #tpu.dot_dimension_numbers<[1], [0], [0], [1], [0, 0, 1, 1], [], []>} : vector<8x64xbf16>, vector<64x32xbf16>, vector<8x32xf32> -> vector<8x32xf32>
    %c0_76 = arith.constant 0 : index
    %c0_77 = arith.constant 0 : index
    %c0_78 = arith.constant 0 : index
    %161 = vector.load %arg17[%c0_76, %c0_77, %c0_78] : memref<1x1x32xf32, #tpu.memory_space<vmem>>, vector<1x1x32xf32>
    %162 = vector.shape_cast %161 : vector<1x1x32xf32> to vector<1x32xf32>
    %163 = vector.broadcast %162 : vector<1x32xf32> to vector<8x32xf32>
    %164 = arith.addf %160, %163 : vector<8x32xf32>
    %165 = arith.addf %146, %164 : vector<8x32xf32>
    %c0_79 = arith.constant 0 : index
    %c0_80 = arith.constant 0 : index
    %c0_81 = arith.constant 0 : index
    %166 = vector.load %arg18[%c0_79, %c0_80, %c0_81] : memref<1x1x32xf32, #tpu.memory_space<vmem>>, vector<1x1x32xf32>
    %167 = vector.shape_cast %166 : vector<1x1x32xf32> to vector<1x32xf32>
    %c0_82 = arith.constant 0 : index
    %c0_83 = arith.constant 0 : index
    %c0_84 = arith.constant 0 : index
    %168 = vector.load %arg19[%c0_82, %c0_83, %c0_84] : memref<1x1x32xf32, #tpu.memory_space<vmem>>, vector<1x1x32xf32>
    %169 = vector.shape_cast %168 : vector<1x1x32xf32> to vector<1x32xf32>
    %cst_85 = arith.constant dense<0.000000e+00> : vector<8xf32>
    %170 = vector.multi_reduction <add>, %165, %cst_85 [1] : vector<8x32xf32> to vector<8xf32>
    %171 = vector.shape_cast %170 : vector<8xf32> to vector<8x1xf32>
    %cst_86 = arith.constant 3.200000e+01 : f32
    %172 = vector.broadcast %cst_86 : f32 to vector<8x1xf32>
    %173 = arith.divf %171, %172 : vector<8x1xf32>
    %174 = vector.broadcast %173 : vector<8x1xf32> to vector<8x32xf32>
    %175 = arith.subf %165, %174 : vector<8x32xf32>
    %176 = arith.mulf %175, %175 : vector<8x32xf32>
    %cst_87 = arith.constant dense<0.000000e+00> : vector<8xf32>
    %177 = vector.multi_reduction <add>, %176, %cst_87 [1] : vector<8x32xf32> to vector<8xf32>
    %178 = vector.shape_cast %177 : vector<8xf32> to vector<8x1xf32>
    %cst_88 = arith.constant 3.200000e+01 : f32
    %179 = vector.broadcast %cst_88 : f32 to vector<8x1xf32>
    %180 = arith.divf %178, %179 : vector<8x1xf32>
    %181 = vector.broadcast %173 : vector<8x1xf32> to vector<8x32xf32>
    %182 = arith.subf %165, %181 : vector<8x32xf32>
    %cst_89 = arith.constant 9.99999974E-6 : f32
    %183 = vector.broadcast %cst_89 : f32 to vector<8x1xf32>
    %184 = arith.addf %180, %183 : vector<8x1xf32>
    %185 = math.rsqrt %184 : vector<8x1xf32>
    %186 = vector.broadcast %185 : vector<8x1xf32> to vector<8x32xf32>
    %187 = arith.mulf %182, %186 : vector<8x32xf32>
    %188 = vector.broadcast %167 : vector<1x32xf32> to vector<8x32xf32>
    %189 = arith.mulf %187, %188 : vector<8x32xf32>
    %190 = vector.broadcast %169 : vector<1x32xf32> to vector<8x32xf32>
    %191 = arith.addf %189, %190 : vector<8x32xf32>
    %c0_90 = arith.constant 0 : index
    %c0_91 = arith.constant 0 : index
    %192 = vector.load %arg20[%c0_90, %c0_91] : memref<8x32xf32, #tpu.memory_space<vmem>>, vector<8x32xf32>
    tpu.vector_store %arg20[%c0_90, %c0_91], %191 {strides = array<i32>} : memref<8x32xf32, #tpu.memory_space<vmem>>, vector<8x32xf32>,
    return
  }
  func.func @transform_0(%arg0: i32, %arg1: i32) -> (i32, i32) {
    %c0_i32 = arith.constant 0 : i32
    %c0_i32_0 = arith.constant 0 : i32
    return %arg0, %c0_i32 : i32, i32
  }
  func.func @transform_1(%arg0: i32, %arg1: i32) -> (i32, i32) {
    %c0_i32 = arith.constant 0 : i32
    %c0_i32_0 = arith.constant 0 : i32
    return %arg0, %c0_i32 : i32, i32
  }
  func.func @transform_2(%arg0: i32, %arg1: i32) -> (i32, i32, i32) {
    %c0_i32 = arith.constant 0 : i32
    %c0_i32_0 = arith.constant 0 : i32
    %c0_i32_1 = arith.constant 0 : i32
    return %arg1, %c0_i32, %c0_i32_0 : i32, i32, i32
  }
  func.func @transform_3(%arg0: i32, %arg1: i32) -> (i32, i32, i32) {
    %c0_i32 = arith.constant 0 : i32
    %c0_i32_0 = arith.constant 0 : i32
    %c0_i32_1 = arith.constant 0 : i32
    return %arg1, %c0_i32, %c0_i32_0 : i32, i32, i32
  }
  func.func @transform_4(%arg0: i32, %arg1: i32) -> (i32, i32, i32) {
    %c0_i32 = arith.constant 0 : i32
    %c0_i32_0 = arith.constant 0 : i32
    %c0_i32_1 = arith.constant 0 : i32
    return %arg1, %c0_i32, %c0_i32_0 : i32, i32, i32
  }
  func.func @transform_5(%arg0: i32, %arg1: i32) -> (i32, i32, i32) {
    %c0_i32 = arith.constant 0 : i32
    %c0_i32_0 = arith.constant 0 : i32
    %c0_i32_1 = arith.constant 0 : i32
    return %arg1, %c0_i32, %c0_i32_0 : i32, i32, i32
  }
  func.func @transform_6(%arg0: i32, %arg1: i32) -> (i32, i32, i32) {
    %c0_i32 = arith.constant 0 : i32
    %c0_i32_0 = arith.constant 0 : i32
    %c0_i32_1 = arith.constant 0 : i32
    return %arg1, %c0_i32, %c0_i32_0 : i32, i32, i32
  }
  func.func @transform_7(%arg0: i32, %arg1: i32) -> (i32, i32, i32) {
    %c0_i32 = arith.constant 0 : i32
    %c0_i32_0 = arith.constant 0 : i32
    %c0_i32_1 = arith.constant 0 : i32
    return %arg1, %c0_i32, %c0_i32_0 : i32, i32, i32
  }
  func.func @transform_8(%arg0: i32, %arg1: i32) -> (i32, i32, i32) {
    %c0_i32 = arith.constant 0 : i32
    %c0_i32_0 = arith.constant 0 : i32
    %c0_i32_1 = arith.constant 0 : i32
    return %arg1, %c0_i32, %c0_i32_0 : i32, i32, i32
  }
  func.func @transform_9(%arg0: i32, %arg1: i32) -> (i32, i32, i32) {
    %c0_i32 = arith.constant 0 : i32
    %c0_i32_0 = arith.constant 0 : i32
    %c0_i32_1 = arith.constant 0 : i32
    return %arg1, %c0_i32, %c0_i32_0 : i32, i32, i32
  }
  func.func @transform_10(%arg0: i32, %arg1: i32) -> (i32, i32, i32) {
    %c0_i32 = arith.constant 0 : i32
    %c0_i32_0 = arith.constant 0 : i32
    %c0_i32_1 = arith.constant 0 : i32
    return %arg1, %c0_i32, %c0_i32_0 : i32, i32, i32
  }
  func.func @transform_11(%arg0: i32, %arg1: i32) -> (i32, i32, i32) {
    %c0_i32 = arith.constant 0 : i32
    %c0_i32_0 = arith.constant 0 : i32
    %c0_i32_1 = arith.constant 0 : i32
    return %arg1, %c0_i32, %c0_i32_0 : i32, i32, i32
  }
  func.func @transform_12(%arg0: i32, %arg1: i32) -> (i32, i32, i32) {
    %c0_i32 = arith.constant 0 : i32
    %c0_i32_0 = arith.constant 0 : i32
    %c0_i32_1 = arith.constant 0 : i32
    return %arg1, %c0_i32, %c0_i32_0 : i32, i32, i32
  }
  func.func @transform_13(%arg0: i32, %arg1: i32) -> (i32, i32, i32) {
    %c0_i32 = arith.constant 0 : i32
    %c0_i32_0 = arith.constant 0 : i32
    %c0_i32_1 = arith.constant 0 : i32
    return %arg1, %c0_i32, %c0_i32_0 : i32, i32, i32
  }
  func.func @transform_14(%arg0: i32, %arg1: i32) -> (i32, i32, i32) {
    %c0_i32 = arith.constant 0 : i32
    %c0_i32_0 = arith.constant 0 : i32
    %c0_i32_1 = arith.constant 0 : i32
    return %arg1, %c0_i32, %c0_i32_0 : i32, i32, i32
  }
  func.func @transform_15(%arg0: i32, %arg1: i32) -> (i32, i32, i32) {
    %c0_i32 = arith.constant 0 : i32
    %c0_i32_0 = arith.constant 0 : i32
    %c0_i32_1 = arith.constant 0 : i32
    return %arg1, %c0_i32, %c0_i32_0 : i32, i32, i32
  }
  func.func @transform_16(%arg0: i32, %arg1: i32) -> (i32, i32, i32) {
    %c0_i32 = arith.constant 0 : i32
    %c0_i32_0 = arith.constant 0 : i32
    %c0_i32_1 = arith.constant 0 : i32
    return %arg1, %c0_i32, %c0_i32_0 : i32, i32, i32
  }
  func.func @transform_17(%arg0: i32, %arg1: i32) -> (i32, i32, i32) {
    %c0_i32 = arith.constant 0 : i32
    %c0_i32_0 = arith.constant 0 : i32
    %c0_i32_1 = arith.constant 0 : i32
    return %arg1, %c0_i32, %c0_i32_0 : i32, i32, i32
  }
  func.func @transform_18(%arg0: i32, %arg1: i32) -> (i32, i32) {
    %c0_i32 = arith.constant 0 : i32
    %c0_i32_0 = arith.constant 0 : i32
    return %arg0, %c0_i32 : i32, i32
  }
  func.func @transform_19(%arg0: i32, %arg1: i32) -> (i32, i32, i32, i32) {
    %c0_i32 = arith.constant 0 : i32
    %c0_i32_0 = arith.constant 0 : i32
    %c0_i32_1 = arith.constant 0 : i32
    return %arg1, %arg0, %c0_i32, %c0_i32_0 : i32, i32, i32, i32
  }
}

</mosaic_0001>

<llo_original>
// kernel: tpu_custom_call.1
$region0: #{tpu_custom_call.1}
  #allocation0 [shape = 'u32[]', space=smem, size = 0x4, offset = 0x4, fixed_abs, tag = 'smem constant byte address 0x4 - core index']
  #allocation1 [shape = 'u32[144,128]{1,0:T(1,128)}', space=vmem, size = 0x12000, scoped, tag = 'internal scratch']
  %s0 = inlined_call_operand.hbm [shape: f32[16,32], index: 0, kind: input, shape index: {}]
  %s1 = inlined_call_operand.hbm [shape: bf16[16,32], index: 1, kind: input, shape index: {}]
  %s2 = inlined_call_operand.hbm [shape: bf16[2,32,32], index: 2, kind: input, shape index: {}]
  %s3 = inlined_call_operand.hbm [shape: f32[2,1,32], index: 3, kind: input, shape index: {}]
  %s4 = inlined_call_operand.hbm [shape: bf16[2,32,32], index: 4, kind: input, shape index: {}]
  %s5 = inlined_call_operand.hbm [shape: f32[2,1,32], index: 5, kind: input, shape index: {}]
  %s6 = inlined_call_operand.hbm [shape: bf16[2,32,32], index: 6, kind: input, shape index: {}]
  %s7 = inlined_call_operand.hbm [shape: f32[2,1,32], index: 7, kind: input, shape index: {}]
  %s8 = inlined_call_operand.hbm [shape: bf16[2,32,32], index: 8, kind: input, shape index: {}]
  %s9 = inlined_call_operand.hbm [shape: f32[2,1,32], index: 9, kind: input, shape index: {}]
  %s10 = inlined_call_operand.hbm [shape: f32[2,1,32], index: 10, kind: input, shape index: {}]
  %s11 = inlined_call_operand.hbm [shape: f32[2,1,32], index: 11, kind: input, shape index: {}]
  %s12 = inlined_call_operand.hbm [shape: bf16[2,32,64], index: 12, kind: input, shape index: {}]
  %s13 = inlined_call_operand.hbm [shape: f32[2,1,64], index: 13, kind: input, shape index: {}]
  %s14 = inlined_call_operand.hbm [shape: bf16[2,64,32], index: 14, kind: input, shape index: {}]
  %s15 = inlined_call_operand.hbm [shape: f32[2,1,32], index: 15, kind: input, shape index: {}]
  %s16 = inlined_call_operand.hbm [shape: f32[2,1,32], index: 16, kind: input, shape index: {}]
  %s17 = inlined_call_operand.hbm [shape: f32[2,1,32], index: 17, kind: input, shape index: {}]
  %s18 = inlined_call_operand.hbm [shape: f32[16,32], index: 18, kind: output, shape index: {0}]
  %s19 = inlined_call_operand.hbm [shape: f32[2,2,8,8], index: 19, kind: output, shape index: {1}]
  %20 = xla_tuple %s18, %s19
  %s21 = sld [smem:[#allocation0]]
  $region189: #{tpu_custom_call.1} parent=0
    _
  %s23 = ssub.s32 1, %s21
  %s24 = scalar_select 0, %s23, %s21
  $region1: #{tpu_custom_call.1} parent=0
    #allocation2 [shape = 'u8[8192]{0}', space=vmem, size = 0x2000, scoped, tag = 'input window, operand 0']
    #allocation3 [shape = 's32[2]{0}', space=sflag, size = 0x8, scoped, tag = 'scoped memory for tpu_custom_call.1']
    #allocation4 [shape = 's32[2]{0}', space=sflag, size = 0x8, scoped, tag = 'scoped memory for tpu_custom_call.1']
    #allocation5 [shape = 'u8[4096]{0}', space=vmem, size = 0x1000, scoped, tag = 'input window, operand 1']
    #allocation6 [shape = 's32[2]{0}', space=sflag, size = 0x8, scoped, tag = 'scoped memory for tpu_custom_call.1']
    #allocation7 [shape = 'u8[16384]{0}', space=vmem, size = 0x4000, scoped, tag = 'input window, operand 2']
    #allocation8 [shape = 'u8[1024]{0}', space=vmem, size = 0x400, scoped, tag = 'input window, operand 3']
    #allocation9 [shape = 's32[2]{0}', space=sflag, size = 0x8, scoped, tag = 'scoped memory for tpu_custom_call.1']
    #allocation10 [shape = 'u8[16384]{0}', space=vmem, size = 0x4000, scoped, tag = 'input window, operand 4']
    #allocation11 [shape = 'u8[1024]{0}', space=vmem, size = 0x400, scoped, tag = 'input window, operand 5']
    #allocation12 [shape = 's32[2]{0}', space=sflag, size = 0x8, scoped, tag = 'scoped memory for tpu_custom_call.1']
    #allocation13 [shape = 'u8[16384]{0}', space=vmem, size = 0x4000, scoped, tag = 'input window, operand 6']
    #allocation14 [shape = 'u8[1024]{0}', space=vmem, size = 0x400, scoped, tag = 'input window, operand 7']
    #allocation15 [shape = 's32[2]{0}', space=sflag, size = 0x8, scoped, tag = 'scoped memory for tpu_custom_call.1']
    #allocation16 [shape = 'u8[16384]{0}', space=vmem, size = 0x4000, scoped, tag = 'input window, operand 8']
    #allocation17 [shape = 'u8[1024]{0}', space=vmem, size = 0x400, scoped, tag = 'input window, operand 9']
    #allocation18 [shape = 's32[2]{0}', space=sflag, size = 0x8, scoped, tag = 'scoped memory for tpu_custom_call.1']
    #allocation19 [shape = 'u8[1024]{0}', space=vmem, size = 0x400, scoped, tag = 'input window, operand 10']
    #allocation20 [shape = 'u8[1024]{0}', space=vmem, size = 0x400, scoped, tag = 'input window, operand 11']
    #allocation21 [shape = 's32[2]{0}', space=sflag, size = 0x8, scoped, tag = 'scoped memory for tpu_custom_call.1']
    #allocation22 [shape = 'u8[16384]{0}', space=vmem, size = 0x4000, scoped, tag = 'input window, operand 12']
    #allocation23 [shape = 'u8[1024]{0}', space=vmem, size = 0x400, scoped, tag = 'input window, operand 13']
    #allocation24 [shape = 's32[2]{0}', space=sflag, size = 0x8, scoped, tag = 'scoped memory for tpu_custom_call.1']
    #allocation25 [shape = 'u8[32768]{0}', space=vmem, size = 0x8000, scoped, tag = 'input window, operand 14']
    #allocation26 [shape = 'u8[1024]{0}', space=vmem, size = 0x400, scoped, tag = 'input window, operand 15']
    #allocation27 [shape = 's32[2]{0}', space=sflag, size = 0x8, scoped, tag = 'scoped memory for tpu_custom_call.1']
    #allocation28 [shape = 'u8[1024]{0}', space=vmem, size = 0x400, scoped, tag = 'input window, operand 16']
    #allocation29 [shape = 'u8[1024]{0}', space=vmem, size = 0x400, scoped, tag = 'input window, operand 17']
    #allocation30 [shape = 's32[2]{0}', space=sflag, size = 0x8, scoped, tag = 'scoped memory for tpu_custom_call.1']
    #allocation31 [shape = 'u8[8192]{0}', space=vmem, size = 0x2000, scoped, tag = 'output window, operand 0']
    #allocation32 [shape = 'u8[8192]{0}', space=vmem, size = 0x2000, scoped, tag = 'output window, operand 1']
    #allocation33 [shape = 's32[2]{0}', space=sflag, size = 0x8, scoped, tag = 'scoped memory for tpu_custom_call.1']
    %25 = vsyncpa [#allocation3], 0
    %s26 = scalar_lea.sflag [#allocation3], 1
    %27 = vsyncpa %s26, 0
    %28 = vsyncpa [#allocation6], 0
    %s29 = scalar_lea.sflag [#allocation6], 1
    %30 = vsyncpa %s29, 0
    %31 = vsyncpa [#allocation9], 0
    %s32 = scalar_lea.sflag [#allocation9], 1
    %33 = vsyncpa %s32, 0
    %34 = vsyncpa [#allocation12], 0
    %s35 = scalar_lea.sflag [#allocation12], 1
    %36 = vsyncpa %s35, 0
    %37 = vsyncpa [#allocation15], 0
    %s38 = scalar_lea.sflag [#allocation15], 1
    %39 = vsyncpa %s38, 0
    %40 = vsyncpa [#allocation18], 0
    %s41 = scalar_lea.sflag [#allocation18], 1
    %42 = vsyncpa %s41, 0
    %43 = vsyncpa [#allocation21], 0
    %s44 = scalar_lea.sflag [#allocation21], 1
    %45 = vsyncpa %s44, 0
    %46 = vsyncpa [#allocation24], 0
    %s47 = scalar_lea.sflag [#allocation24], 1
    %48 = vsyncpa %s47, 0
    %49 = vsyncpa [#allocation27], 0
    %s50 = scalar_lea.sflag [#allocation27], 1
    %51 = vsyncpa %s50, 0
    %52 = vsyncpa [#allocation30], 0
    %s53 = scalar_lea.sflag [#allocation30], 1
    %54 = vsyncpa %s53, 0
    %55 = vsyncpa [#allocation4], 0
    %s56 = scalar_lea.sflag [#allocation4], 1
    %57 = vsyncpa %s56, 0
    %58 = vsyncpa [#allocation33], 0
    %s59 = scalar_lea.sflag [#allocation33], 1
    %60 = vsyncpa %s59, 0
    loop: start=0, step=1, limit=6
    $region2: #{tpu_custom_call.1} parent=1 // loop_pre_header
      _
    $region3: #{tpu_custom_call.1} parent=1 // loop_header
      %s62 = sphi 0, %s66
      %p63 = scmp.ge.s32.totalorder %s62, 6
      %s69 = sphi 0, %s81
      %s70 = sphi 0, %s77
      %s71 = sphi 0, %s69
      %s72 = sphi 0, %s70
      %s73 = sphi 0, %s71
      %s74 = sphi 0, %s72
      %s84 = sphi 0, %s86
      %s87 = sphi 0, %s84
      %s88 = sphi 0, %s87
      %s104 = sphi 0, %s88
      %s110 = sphi 0, %s112
      %s113 = sphi 0, %s110
      %s114 = sphi 0, %s113
      %s130 = sphi 0, %s114
      %s136 = sphi 0, %s138
      %s139 = sphi 0, %s136
      %s140 = sphi 0, %s139
      %s156 = sphi 0, %s140
      %s162 = sphi 0, %s164
      %s165 = sphi 0, %s162
      %s166 = sphi 0, %s165
      %s182 = sphi 0, %s166
      %s188 = sphi 0, %s190
      %s191 = sphi 0, %s188
      %s192 = sphi 0, %s191
      %s208 = sphi 0, %s192
      %s214 = sphi 0, %s216
      %s217 = sphi 0, %s214
      %s218 = sphi 0, %s217
      %s234 = sphi 0, %s218
      %s240 = sphi 0, %s242
      %s243 = sphi 0, %s240
      %s244 = sphi 0, %s243
      %s260 = sphi 0, %s244
      %s266 = sphi 0, %s268
      %s269 = sphi 0, %s266
      %s270 = sphi 0, %s269
      %s286 = sphi 0, %s270
      %s292 = sphi 0, %s294
      %s295 = sphi 0, %s292
      %s296 = sphi 0, %s295
      %s312 = sphi 0, %s296
      %s318 = sphi 0, %s320
      %s321 = sphi 0, %s318
      %s322 = sphi 0, %s321
      %s338 = sphi 0, %s322
      %s344 = sphi 0, %s346
      %s347 = sphi 0, %s344
      %s348 = sphi 0, %s347
      %s364 = sphi 0, %s348
      %s370 = sphi 0, %s372
      %s373 = sphi 0, %s370
      %s374 = sphi 0, %s373
      %s390 = sphi 0, %s374
      %s396 = sphi 0, %s398
      %s399 = sphi 0, %s396
      %s400 = sphi 0, %s399
      %s416 = sphi 0, %s400
      %s422 = sphi 0, %s424
      %s425 = sphi 0, %s422
      %s426 = sphi 0, %s425
      %s442 = sphi 0, %s426
      %s448 = sphi 0, %s450
      %s451 = sphi 0, %s448
      %s452 = sphi 0, %s451
      %s468 = sphi 0, %s452
      %s474 = sphi 0, %s476
      %s477 = sphi 0, %s474
      %s478 = sphi 0, %s477
      %s494 = sphi 0, %s478
      %s500 = sphi 0, %s502
      %s503 = sphi 0, %s500
      %s504 = sphi 0, %s503
      %s520 = sphi 0, %s504
      %s526 = sphi 0, %s528
      %s529 = sphi 0, %s526
      %s530 = sphi 0, %s529
      %s546 = sphi 0, %s530
      %s552 = sphi 0, %s554
      %s555 = sphi 0, %s552
      %s556 = sphi 0, %s555
      %s572 = sphi 0, %s556
      %s580 = sphi 0, %s582
      %s583 = sphi 0, %s580
      %s584 = sphi 0, %s583
      %s600 = sphi 0, %s584
    $region4: #{tpu_custom_call.1} parent=1 // loop_header_branch
      %65 = sbr.rel (%p63) target = $region8
    $region5: #{tpu_custom_call.1} parent=1 // loop_body
      %s67 = ssub.s32 %s62, 1
      %s68 = ssub.s32 %s62, 2
      %s75 = sadd.s32 1, %s70
      %p76 = scmp.ge.s32.totalorder %s75, 2
      %s77 = scalar_select %p76, 0, %s75
      %s78 = sadd.s32 1, %s69
      %s79 = scalar_select %p76, %s78, %s69
      %p80 = scmp.ge.s32.totalorder %s79, 2
      %s81 = scalar_select %p80, 0, %s79
      %s82 = ssub.s32 %s69, %s81
      %p83 = scmp.eq.s32.totalorder %s82, 0
      %s85 = sadd.s32 %s84, 1
      %s86 = scalar_select %p83, %s84, %s85
      %p89 = pneg %p83
      %p90 = scmp.eq.s32.totalorder %s62, 3
      %p91 = por %p89, %p90
      %p92 = scmp.ne.s32.totalorder %s84, %s87
      %p93 = scmp.eq.s32.totalorder %s62, 0
      %p94 = por %p92, %p93
      %p95 = scmp.ne.s32.totalorder %s84, %s87
      %p96 = scmp.eq.s32.totalorder %s67, 3
      %p97 = por %p95, %p96
      %p98 = scmp.ne.s32.totalorder %s87, %s88
      %p99 = scmp.eq.s32.totalorder %s67, 0
      %p100 = por %p98, %p99
      %p101 = scmp.ne.s32.totalorder %s87, %s88
      %p102 = scmp.eq.s32.totalorder %s68, 3
      %p103 = por %p101, %p102
      %p105 = scmp.ne.s32.totalorder %s88, %s104
      %p106 = scmp.eq.s32.totalorder %s68, 0
      %p107 = por %p105, %p106
      %s108 = ssub.s32 %s69, %s81
      %p109 = scmp.eq.s32.totalorder %s108, 0
      %s111 = sadd.s32 %s110, 1
      %s112 = scalar_select %p109, %s110, %s111
      %p115 = pneg %p109
      %p116 = scmp.eq.s32.totalorder %s62, 3
      %p117 = por %p115, %p116
      %p118 = scmp.ne.s32.totalorder %s110, %s113
      %p119 = scmp.eq.s32.totalorder %s62, 0
      %p120 = por %p118, %p119
      %p121 = scmp.ne.s32.totalorder %s110, %s113
      %p122 = scmp.eq.s32.totalorder %s67, 3
      %p123 = por %p121, %p122
      %p124 = scmp.ne.s32.totalorder %s113, %s114
      %p125 = scmp.eq.s32.totalorder %s67, 0
      %p126 = por %p124, %p125
      %p127 = scmp.ne.s32.totalorder %s113, %s114
      %p128 = scmp.eq.s32.totalorder %s68, 3
      %p129 = por %p127, %p128
      %p131 = scmp.ne.s32.totalorder %s114, %s130
      %p132 = scmp.eq.s32.totalorder %s68, 0
      %p133 = por %p131, %p132
      %s134 = ssub.s32 %s70, %s77
      %p135 = scmp.eq.s32.totalorder %s134, 0
      %s137 = sadd.s32 %s136, 1
      %s138 = scalar_select %p135, %s136, %s137
      %p141 = pneg %p135
      %p142 = scmp.eq.s32.totalorder %s62, 3
      %p143 = por %p141, %p142
      %p144 = scmp.ne.s32.totalorder %s136, %s139
      %p145 = scmp.eq.s32.totalorder %s62, 0
      %p146 = por %p144, %p145
      %p147 = scmp.ne.s32.totalorder %s136, %s139
      %p148 = scmp.eq.s32.totalorder %s67, 3
      %p149 = por %p147, %p148
      %p150 = scmp.ne.s32.totalorder %s139, %s140
      %p151 = scmp.eq.s32.totalorder %s67, 0
      %p152 = por %p150, %p151
      %p153 = scmp.ne.s32.totalorder %s139, %s140
      %p154 = scmp.eq.s32.totalorder %s68, 3
      %p155 = por %p153, %p154
      %p157 = scmp.ne.s32.totalorder %s140, %s156
      %p158 = scmp.eq.s32.totalorder %s68, 0
      %p159 = por %p157, %p158
      %s160 = ssub.s32 %s70, %s77
      %p161 = scmp.eq.s32.totalorder %s160, 0
      %s163 = sadd.s32 %s162, 1
      %s164 = scalar_select %p161, %s162, %s163
      %p167 = pneg %p161
      %p168 = scmp.eq.s32.totalorder %s62, 3
      %p169 = por %p167, %p168
      %p170 = scmp.ne.s32.totalorder %s162, %s165
      %p171 = scmp.eq.s32.totalorder %s62, 0
      %p172 = por %p170, %p171
      %p173 = scmp.ne.s32.totalorder %s162, %s165
      %p174 = scmp.eq.s32.totalorder %s67, 3
      %p175 = por %p173, %p174
      %p176 = scmp.ne.s32.totalorder %s165, %s166
      %p177 = scmp.eq.s32.totalorder %s67, 0
      %p178 = por %p176, %p177
      %p179 = scmp.ne.s32.totalorder %s165, %s166
      %p180 = scmp.eq.s32.totalorder %s68, 3
      %p181 = por %p179, %p180
      %p183 = scmp.ne.s32.totalorder %s166, %s182
      %p184 = scmp.eq.s32.totalorder %s68, 0
      %p185 = por %p183, %p184
      %s186 = ssub.s32 %s70, %s77
      %p187 = scmp.eq.s32.totalorder %s186, 0
      %s189 = sadd.s32 %s188, 1
      %s190 = scalar_select %p187, %s188, %s189
      %p193 = pneg %p187
      %p194 = scmp.eq.s32.totalorder %s62, 3
      %p195 = por %p193, %p194
      %p196 = scmp.ne.s32.totalorder %s188, %s191
      %p197 = scmp.eq.s32.totalorder %s62, 0
      %p198 = por %p196, %p197
      %p199 = scmp.ne.s32.totalorder %s188, %s191
      %p200 = scmp.eq.s32.totalorder %s67, 3
      %p201 = por %p199, %p200
      %p202 = scmp.ne.s32.totalorder %s191, %s192
      %p203 = scmp.eq.s32.totalorder %s67, 0
      %p204 = por %p202, %p203
      %p205 = scmp.ne.s32.totalorder %s191, %s192
      %p206 = scmp.eq.s32.totalorder %s68, 3
      %p207 = por %p205, %p206
      %p209 = scmp.ne.s32.totalorder %s192, %s208
      %p210 = scmp.eq.s32.totalorder %s68, 0
      %p211 = por %p209, %p210
      %s212 = ssub.s32 %s70, %s77
      %p213 = scmp.eq.s32.totalorder %s212, 0
      %s215 = sadd.s32 %s214, 1
      %s216 = scalar_select %p213, %s214, %s215
      %p219 = pneg %p213
      %p220 = scmp.eq.s32.totalorder %s62, 3
      %p221 = por %p219, %p220
      %p222 = scmp.ne.s32.totalorder %s214, %s217
      %p223 = scmp.eq.s32.totalorder %s62, 0
      %p224 = por %p222, %p223
      %p225 = scmp.ne.s32.totalorder %s214, %s217
      %p226 = scmp.eq.s32.totalorder %s67, 3
      %p227 = por %p225, %p226
      %p228 = scmp.ne.s32.totalorder %s217, %s218
      %p229 = scmp.eq.s32.totalorder %s67, 0
      %p230 = por %p228, %p229
      %p231 = scmp.ne.s32.totalorder %s217, %s218
      %p232 = scmp.eq.s32.totalorder %s68, 3
      %p233 = por %p231, %p232
      %p235 = scmp.ne.s32.totalorder %s218, %s234
      %p236 = scmp.eq.s32.totalorder %s68, 0
      %p237 = por %p235, %p236
      %s238 = ssub.s32 %s70, %s77
      %p239 = scmp.eq.s32.totalorder %s238, 0
      %s241 = sadd.s32 %s240, 1
      %s242 = scalar_select %p239, %s240, %s241
      %p245 = pneg %p239
      %p246 = scmp.eq.s32.totalorder %s62, 3
      %p247 = por %p245, %p246
      %p248 = scmp.ne.s32.totalorder %s240, %s243
      %p249 = scmp.eq.s32.totalorder %s62, 0
      %p250 = por %p248, %p249
      %p251 = scmp.ne.s32.totalorder %s240, %s243
      %p252 = scmp.eq.s32.totalorder %s67, 3
      %p253 = por %p251, %p252
      %p254 = scmp.ne.s32.totalorder %s243, %s244
      %p255 = scmp.eq.s32.totalorder %s67, 0
      %p256 = por %p254, %p255
      %p257 = scmp.ne.s32.totalorder %s243, %s244
      %p258 = scmp.eq.s32.totalorder %s68, 3
      %p259 = por %p257, %p258
      %p261 = scmp.ne.s32.totalorder %s244, %s260
      %p262 = scmp.eq.s32.totalorder %s68, 0
      %p263 = por %p261, %p262
      %s264 = ssub.s32 %s70, %s77
      %p265 = scmp.eq.s32.totalorder %s264, 0
      %s267 = sadd.s32 %s266, 1
      %s268 = scalar_select %p265, %s266, %s267
      %p271 = pneg %p265
      %p272 = scmp.eq.s32.totalorder %s62, 3
      %p273 = por %p271, %p272
      %p274 = scmp.ne.s32.totalorder %s266, %s269
      %p275 = scmp.eq.s32.totalorder %s62, 0
      %p276 = por %p274, %p275
      %p277 = scmp.ne.s32.totalorder %s266, %s269
      %p278 = scmp.eq.s32.totalorder %s67, 3
      %p279 = por %p277, %p278
      %p280 = scmp.ne.s32.totalorder %s269, %s270
      %p281 = scmp.eq.s32.totalorder %s67, 0
      %p282 = por %p280, %p281
      %p283 = scmp.ne.s32.totalorder %s269, %s270
      %p284 = scmp.eq.s32.totalorder %s68, 3
      %p285 = por %p283, %p284
      %p287 = scmp.ne.s32.totalorder %s270, %s286
      %p288 = scmp.eq.s32.totalorder %s68, 0
      %p289 = por %p287, %p288
      %s290 = ssub.s32 %s70, %s77
      %p291 = scmp.eq.s32.totalorder %s290, 0
      %s293 = sadd.s32 %s292, 1
      %s294 = scalar_select %p291, %s292, %s293
      %p297 = pneg %p291
      %p298 = scmp.eq.s32.totalorder %s62, 3
      %p299 = por %p297, %p298
      %p300 = scmp.ne.s32.totalorder %s292, %s295
      %p301 = scmp.eq.s32.totalorder %s62, 0
      %p302 = por %p300, %p301
      %p303 = scmp.ne.s32.totalorder %s292, %s295
      %p304 = scmp.eq.s32.totalorder %s67, 3
      %p305 = por %p303, %p304
      %p306 = scmp.ne.s32.totalorder %s295, %s296
      %p307 = scmp.eq.s32.totalorder %s67, 0
      %p308 = por %p306, %p307
      %p309 = scmp.ne.s32.totalorder %s295, %s296
      %p310 = scmp.eq.s32.totalorder %s68, 3
      %p311 = por %p309, %p310
      %p313 = scmp.ne.s32.totalorder %s296, %s312
      %p314 = scmp.eq.s32.totalorder %s68, 0
      %p315 = por %p313, %p314
      %s316 = ssub.s32 %s70, %s77
      %p317 = scmp.eq.s32.totalorder %s316, 0
      %s319 = sadd.s32 %s318, 1
      %s320 = scalar_select %p317, %s318, %s319
      %p323 = pneg %p317
      %p324 = scmp.eq.s32.totalorder %s62, 3
      %p325 = por %p323, %p324
      %p326 = scmp.ne.s32.totalorder %s318, %s321
      %p327 = scmp.eq.s32.totalorder %s62, 0
      %p328 = por %p326, %p327
      %p329 = scmp.ne.s32.totalorder %s318, %s321
      %p330 = scmp.eq.s32.totalorder %s67, 3
      %p331 = por %p329, %p330
      %p332 = scmp.ne.s32.totalorder %s321, %s322
      %p333 = scmp.eq.s32.totalorder %s67, 0
      %p334 = por %p332, %p333
      %p335 = scmp.ne.s32.totalorder %s321, %s322
      %p336 = scmp.eq.s32.totalorder %s68, 3
      %p337 = por %p335, %p336
      %p339 = scmp.ne.s32.totalorder %s322, %s338
      %p340 = scmp.eq.s32.totalorder %s68, 0
      %p341 = por %p339, %p340
      %s342 = ssub.s32 %s70, %s77
      %p343 = scmp.eq.s32.totalorder %s342, 0
      %s345 = sadd.s32 %s344, 1
      %s346 = scalar_select %p343, %s344, %s345
      %p349 = pneg %p343
      %p350 = scmp.eq.s32.totalorder %s62, 3
      %p351 = por %p349, %p350
      %p352 = scmp.ne.s32.totalorder %s344, %s347
      %p353 = scmp.eq.s32.totalorder %s62, 0
      %p354 = por %p352, %p353
      %p355 = scmp.ne.s32.totalorder %s344, %s347
      %p356 = scmp.eq.s32.totalorder %s67, 3
      %p357 = por %p355, %p356
      %p358 = scmp.ne.s32.totalorder %s347, %s348
      %p359 = scmp.eq.s32.totalorder %s67, 0
      %p360 = por %p358, %p359
      %p361 = scmp.ne.s32.totalorder %s347, %s348
      %p362 = scmp.eq.s32.totalorder %s68, 3
      %p363 = por %p361, %p362
      %p365 = scmp.ne.s32.totalorder %s348, %s364
      %p366 = scmp.eq.s32.totalorder %s68, 0
      %p367 = por %p365, %p366
      %s368 = ssub.s32 %s70, %s77
      %p369 = scmp.eq.s32.totalorder %s368, 0
      %s371 = sadd.s32 %s370, 1
      %s372 = scalar_select %p369, %s370, %s371
      %p375 = pneg %p369
      %p376 = scmp.eq.s32.totalorder %s62, 3
      %p377 = por %p375, %p376
      %p378 = scmp.ne.s32.totalorder %s370, %s373
      %p379 = scmp.eq.s32.totalorder %s62, 0
      %p380 = por %p378, %p379
      %p381 = scmp.ne.s32.totalorder %s370, %s373
      %p382 = scmp.eq.s32.totalorder %s67, 3
      %p383 = por %p381, %p382
      %p384 = scmp.ne.s32.totalorder %s373, %s374
      %p385 = scmp.eq.s32.totalorder %s67, 0
      %p386 = por %p384, %p385
      %p387 = scmp.ne.s32.totalorder %s373, %s374
      %p388 = scmp.eq.s32.totalorder %s68, 3
      %p389 = por %p387, %p388
      %p391 = scmp.ne.s32.totalorder %s374, %s390
      %p392 = scmp.eq.s32.totalorder %s68, 0
      %p393 = por %p391, %p392
      %s394 = ssub.s32 %s70, %s77
      %p395 = scmp.eq.s32.totalorder %s394, 0
      %s397 = sadd.s32 %s396, 1
      %s398 = scalar_select %p395, %s396, %s397
      %p401 = pneg %p395
      %p402 = scmp.eq.s32.totalorder %s62, 3
      %p403 = por %p401, %p402
      %p404 = scmp.ne.s32.totalorder %s396, %s399
      %p405 = scmp.eq.s32.totalorder %s62, 0
      %p406 = por %p404, %p405
      %p407 = scmp.ne.s32.totalorder %s396, %s399
      %p408 = scmp.eq.s32.totalorder %s67, 3
      %p409 = por %p407, %p408
      %p410 = scmp.ne.s32.totalorder %s399, %s400
      %p411 = scmp.eq.s32.totalorder %s67, 0
      %p412 = por %p410, %p411
      %p413 = scmp.ne.s32.totalorder %s399, %s400
      %p414 = scmp.eq.s32.totalorder %s68, 3
      %p415 = por %p413, %p414
      %p417 = scmp.ne.s32.totalorder %s400, %s416
      %p418 = scmp.eq.s32.totalorder %s68, 0
      %p419 = por %p417, %p418
      %s420 = ssub.s32 %s70, %s77
      %p421 = scmp.eq.s32.totalorder %s420, 0
      %s423 = sadd.s32 %s422, 1
      %s424 = scalar_select %p421, %s422, %s423
      %p427 = pneg %p421
      %p428 = scmp.eq.s32.totalorder %s62, 3
      %p429 = por %p427, %p428
      %p430 = scmp.ne.s32.totalorder %s422, %s425
      %p431 = scmp.eq.s32.totalorder %s62, 0
      %p432 = por %p430, %p431
      %p433 = scmp.ne.s32.totalorder %s422, %s425
      %p434 = scmp.eq.s32.totalorder %s67, 3
      %p435 = por %p433, %p434
      %p436 = scmp.ne.s32.totalorder %s425, %s426
      %p437 = scmp.eq.s32.totalorder %s67, 0
      %p438 = por %p436, %p437
      %p439 = scmp.ne.s32.totalorder %s425, %s426
      %p440 = scmp.eq.s32.totalorder %s68, 3
      %p441 = por %p439, %p440
      %p443 = scmp.ne.s32.totalorder %s426, %s442
      %p444 = scmp.eq.s32.totalorder %s68, 0
      %p445 = por %p443, %p444
      %s446 = ssub.s32 %s70, %s77
      %p447 = scmp.eq.s32.totalorder %s446, 0
      %s449 = sadd.s32 %s448, 1
      %s450 = scalar_select %p447, %s448, %s449
      %p453 = pneg %p447
      %p454 = scmp.eq.s32.totalorder %s62, 3
      %p455 = por %p453, %p454
      %p456 = scmp.ne.s32.totalorder %s448, %s451
      %p457 = scmp.eq.s32.totalorder %s62, 0
      %p458 = por %p456, %p457
      %p459 = scmp.ne.s32.totalorder %s448, %s451
      %p460 = scmp.eq.s32.totalorder %s67, 3
      %p461 = por %p459, %p460
      %p462 = scmp.ne.s32.totalorder %s451, %s452
      %p463 = scmp.eq.s32.totalorder %s67, 0
      %p464 = por %p462, %p463
      %p465 = scmp.ne.s32.totalorder %s451, %s452
      %p466 = scmp.eq.s32.totalorder %s68, 3
      %p467 = por %p465, %p466
      %p469 = scmp.ne.s32.totalorder %s452, %s468
      %p470 = scmp.eq.s32.totalorder %s68, 0
      %p471 = por %p469, %p470
      %s472 = ssub.s32 %s70, %s77
      %p473 = scmp.eq.s32.totalorder %s472, 0
      %s475 = sadd.s32 %s474, 1
      %s476 = scalar_select %p473, %s474, %s475
      %p479 = pneg %p473
      %p480 = scmp.eq.s32.totalorder %s62, 3
      %p481 = por %p479, %p480
      %p482 = scmp.ne.s32.totalorder %s474, %s477
      %p483 = scmp.eq.s32.totalorder %s62, 0
      %p484 = por %p482, %p483
      %p485 = scmp.ne.s32.totalorder %s474, %s477
      %p486 = scmp.eq.s32.totalorder %s67, 3
      %p487 = por %p485, %p486
      %p488 = scmp.ne.s32.totalorder %s477, %s478
      %p489 = scmp.eq.s32.totalorder %s67, 0
      %p490 = por %p488, %p489
      %p491 = scmp.ne.s32.totalorder %s477, %s478
      %p492 = scmp.eq.s32.totalorder %s68, 3
      %p493 = por %p491, %p492
      %p495 = scmp.ne.s32.totalorder %s478, %s494
      %p496 = scmp.eq.s32.totalorder %s68, 0
      %p497 = por %p495, %p496
      %s498 = ssub.s32 %s70, %s77
      %p499 = scmp.eq.s32.totalorder %s498, 0
      %s501 = sadd.s32 %s500, 1
      %s502 = scalar_select %p499, %s500, %s501
      %p505 = pneg %p499
      %p506 = scmp.eq.s32.totalorder %s62, 3
      %p507 = por %p505, %p506
      %p508 = scmp.ne.s32.totalorder %s500, %s503
      %p509 = scmp.eq.s32.totalorder %s62, 0
      %p510 = por %p508, %p509
      %p511 = scmp.ne.s32.totalorder %s500, %s503
      %p512 = scmp.eq.s32.totalorder %s67, 3
      %p513 = por %p511, %p512
      %p514 = scmp.ne.s32.totalorder %s503, %s504
      %p515 = scmp.eq.s32.totalorder %s67, 0
      %p516 = por %p514, %p515
      %p517 = scmp.ne.s32.totalorder %s503, %s504
      %p518 = scmp.eq.s32.totalorder %s68, 3
      %p519 = por %p517, %p518
      %p521 = scmp.ne.s32.totalorder %s504, %s520
      %p522 = scmp.eq.s32.totalorder %s68, 0
      %p523 = por %p521, %p522
      %s524 = ssub.s32 %s70, %s77
      %p525 = scmp.eq.s32.totalorder %s524, 0
      %s527 = sadd.s32 %s526, 1
      %s528 = scalar_select %p525, %s526, %s527
      %p531 = pneg %p525
      %p532 = scmp.eq.s32.totalorder %s62, 3
      %p533 = por %p531, %p532
      %p534 = scmp.ne.s32.totalorder %s526, %s529
      %p535 = scmp.eq.s32.totalorder %s62, 0
      %p536 = por %p534, %p535
      %p537 = scmp.ne.s32.totalorder %s526, %s529
      %p538 = scmp.eq.s32.totalorder %s67, 3
      %p539 = por %p537, %p538
      %p540 = scmp.ne.s32.totalorder %s529, %s530
      %p541 = scmp.eq.s32.totalorder %s67, 0
      %p542 = por %p540, %p541
      %p543 = scmp.ne.s32.totalorder %s529, %s530
      %p544 = scmp.eq.s32.totalorder %s68, 3
      %p545 = por %p543, %p544
      %p547 = scmp.ne.s32.totalorder %s530, %s546
      %p548 = scmp.eq.s32.totalorder %s68, 0
      %p549 = por %p547, %p548
      %s550 = ssub.s32 %s69, %s81
      %p551 = scmp.eq.s32.totalorder %s550, 0
      %s553 = sadd.s32 %s552, 1
      %s554 = scalar_select %p551, %s552, %s553
      %p557 = pneg %p551
      %p558 = scmp.eq.s32.totalorder %s62, 3
      %p559 = por %p557, %p558
      %p560 = scmp.ne.s32.totalorder %s552, %s555
      %p561 = scmp.eq.s32.totalorder %s62, 0
      %p562 = por %p560, %p561
      %p563 = scmp.ne.s32.totalorder %s552, %s555
      %p564 = scmp.eq.s32.totalorder %s67, 3
      %p565 = por %p563, %p564
      %p566 = scmp.ne.s32.totalorder %s555, %s556
      %p567 = scmp.eq.s32.totalorder %s67, 0
      %p568 = por %p566, %p567
      %p569 = scmp.ne.s32.totalorder %s555, %s556
      %p570 = scmp.eq.s32.totalorder %s68, 3
      %p571 = por %p569, %p570
      %p573 = scmp.ne.s32.totalorder %s556, %s572
      %p574 = scmp.eq.s32.totalorder %s68, 0
      %p575 = por %p573, %p574
      %s576 = ssub.s32 %s70, %s77
      %s577 = ssub.s32 %s69, %s81
      %s578 = sor.u32 %s576, %s577
      %p579 = scmp.eq.s32.totalorder %s578, 0
      %s581 = sadd.s32 %s580, 1
      %s582 = scalar_select %p579, %s580, %s581
      %p585 = pneg %p579
      %p586 = scmp.eq.s32.totalorder %s62, 3
      %p587 = por %p585, %p586
      %p588 = scmp.ne.s32.totalorder %s580, %s583
      %p589 = scmp.eq.s32.totalorder %s62, 0
      %p590 = por %p588, %p589
      %p591 = scmp.ne.s32.totalorder %s580, %s583
      %p592 = scmp.eq.s32.totalorder %s67, 3
      %p593 = por %p591, %p592
      %p594 = scmp.ne.s32.totalorder %s583, %s584
      %p595 = scmp.eq.s32.totalorder %s67, 0
      %p596 = por %p594, %p595
      %p597 = scmp.ne.s32.totalorder %s583, %s584
      %p598 = scmp.eq.s32.totalorder %s68, 3
      %p599 = por %p597, %p598
      %p601 = scmp.ne.s32.totalorder %s584, %s600
      %p602 = scmp.eq.s32.totalorder %s68, 0
      %p603 = por %p601, %p602
      %p604 = scmp.le.s32.totalorder 1, %s62
      %p605 = scmp.lt.s32.totalorder %s62, 5
      %p606 = pnand %p604, %p605
      %p607 = pneg %p606
      // Predicated region
      $region9: #{tpu_custom_call.1} parent=5 // pred_check
        _
      $region10: #{tpu_custom_call.1} parent=5 // pred_check_branch
        %609 = sbr.rel (%p606) target = $region12
      $region11: #{tpu_custom_call.1} parent=5 // pred_region
        %s610 = ssub.s32 %s62, 1
      $region12: #{tpu_custom_call.1} parent=5 // pred_fallthru
        _
      %p611 = scmp.lt.s32.totalorder %s62, 4
      // Predicated region
      $region13: #{tpu_custom_call.1} parent=5 // pred_check
        %p612 = pneg %p611
      $region14: #{tpu_custom_call.1} parent=5 // pred_check_branch
        %614 = sbr.rel (%p612) target = $region16
      $region15: #{tpu_custom_call.1} parent=5 // pred_region
        // Predicated region
        $region17: #{tpu_custom_call.1} parent=15 // pred_check
          %p615 = pneg %p94
        $region18: #{tpu_custom_call.1} parent=15 // pred_check_branch
          %617 = sbr.rel (%p615) target = $region20
        $region19: #{tpu_custom_call.1} parent=15 // pred_region
          %s618 = sand.u32 %s84, 1
          %s619 = scalar_lea.sflag [#allocation3], %s618
          %s620 = sand.u32 %s84, 1
          %s621 = smul.addr %s620, 8
          %s622 = scalar_lea.vmem [#allocation2], %s621
          %s624 = ssub.s32 128, 128
          %625 = vsyncadd %s619, %s624
          %s626 = smul.addr %s69, 128
          %s627 = scalar_lea.hbm %s0, %s626
          %s629 = sshll.u32 %s622, 4
          %s630 = int_to_ptr.vmem [resolvable:$true] %s629
          %632 = dma.hbm_to_vmem [thread:$0]  %s627, 128, %s630, %s619
        $region20: #{tpu_custom_call.1} parent=15 // pred_fallthru
          _
        // Predicated region
        $region21: #{tpu_custom_call.1} parent=15 // pred_check
          %p633 = pneg %p120
        $region22: #{tpu_custom_call.1} parent=15 // pred_check_branch
          %635 = sbr.rel (%p633) target = $region24
        $region23: #{tpu_custom_call.1} parent=15 // pred_region
          %s636 = sand.u32 %s62, 1
          %s637 = scalar_lea.sflag [#allocation6], %s636
          %s638 = sand.u32 %s110, 1
          %s639 = smul.addr %s638, 4
          %s640 = scalar_lea.vmem [#allocation5], %s639
          %s642 = ssub.s32 64, 64
          %643 = vsyncadd %s637, %s642
          %s644 = smul.addr %s69, 64
          %s645 = scalar_lea.hbm %s1, %s644
          %s647 = sshll.u32 %s640, 4
          %s648 = int_to_ptr.vmem [resolvable:$true] %s647
          %650 = dma.hbm_to_vmem [thread:$0]  %s645, 64, %s648, %s637
        $region24: #{tpu_custom_call.1} parent=15 // pred_fallthru
          _
        // Predicated region
        $region25: #{tpu_custom_call.1} parent=15 // pred_check
          %p651 = pneg %p146
        $region26: #{tpu_custom_call.1} parent=15 // pred_check_branch
          %653 = sbr.rel (%p651) target = $region28
        $region27: #{tpu_custom_call.1} parent=15 // pred_region
          %s654 = sand.u32 %s62, 1
          %s655 = scalar_lea.sflag [#allocation6], %s654
          %s656 = sand.u32 %s136, 1
          %s657 = smul.addr %s656, 16
          %s658 = scalar_lea.vmem [#allocation7], %s657
          %s660 = ssub.s32 256, 256
          %661 = vsyncadd %s655, %s660
          %s662 = smul.addr %s70, 4
          %s663 = smul.addr %s662, 64
          %s664 = scalar_lea.hbm %s2, %s663
          %s665 = sshll.u32 %s658, 4
          %s666 = int_to_ptr.vmem [resolvable:$true] %s665
          %671 = dma.hbm_to_vmem [thread:$0]  %s664, 256, %s666, %s655, 64, 64, 4
        $region28: #{tpu_custom_call.1} parent=15 // pred_fallthru
          _
        // Predicated region
        $region29: #{tpu_custom_call.1} parent=15 // pred_check
          %p672 = pneg %p172
        $region30: #{tpu_custom_call.1} parent=15 // pred_check_branch
          %674 = sbr.rel (%p672) target = $region32
        $region31: #{tpu_custom_call.1} parent=15 // pred_region
          %s675 = sand.u32 %s62, 1
          %s676 = scalar_lea.sflag [#allocation9], %s675
          %s677 = sand.u32 %s162, 1
          %s678 = scalar_lea.vmem [#allocation8], %s677
          %s680 = ssub.s32 16, 16
          %681 = vsyncadd %s676, %s680
          %s682 = smul.addr %s70, 16
          %s683 = scalar_lea.hbm %s3, %s682
          %s685 = sshll.u32 %s678, 4
          %s686 = int_to_ptr.vmem [resolvable:$true] %s685
          %688 = dma.hbm_to_vmem [thread:$0]  %s683, 16, %s686, %s676
        $region32: #{tpu_custom_call.1} parent=15 // pred_fallthru
          _
        // Predicated region
        $region33: #{tpu_custom_call.1} parent=15 // pred_check
          %p689 = pneg %p198
        $region34: #{tpu_custom_call.1} parent=15 // pred_check_branch
          %691 = sbr.rel (%p689) target = $region36
        $region35: #{tpu_custom_call.1} parent=15 // pred_region
          %s692 = sand.u32 %s62, 1
          %s693 = scalar_lea.sflag [#allocation9], %s692
          %s694 = sand.u32 %s188, 1
          %s695 = smul.addr %s694, 16
          %s696 = scalar_lea.vmem [#allocation10], %s695
          %s698 = ssub.s32 256, 256
          %699 = vsyncadd %s693, %s698
          %s700 = smul.addr %s70, 4
          %s701 = smul.addr %s700, 64
          %s702 = scalar_lea.hbm %s4, %s701
          %s703 = sshll.u32 %s696, 4
          %s704 = int_to_ptr.vmem [resolvable:$true] %s703
          %709 = dma.hbm_to_vmem [thread:$0]  %s702, 256, %s704, %s693, 64, 64, 4
        $region36: #{tpu_custom_call.1} parent=15 // pred_fallthru
          _
        // Predicated region
        $region37: #{tpu_custom_call.1} parent=15 // pred_check
          %p710 = pneg %p224
        $region38: #{tpu_custom_call.1} parent=15 // pred_check_branch
          %712 = sbr.rel (%p710) target = $region40
        $region39: #{tpu_custom_call.1} parent=15 // pred_region
          %s713 = sand.u32 %s62, 1
          %s714 = scalar_lea.sflag [#allocation12], %s713
          %s715 = sand.u32 %s214, 1
          %s716 = scalar_lea.vmem [#allocation11], %s715
          %s718 = ssub.s32 16, 16
          %719 = vsyncadd %s714, %s718
          %s720 = smul.addr %s70, 16
          %s721 = scalar_lea.hbm %s5, %s720
          %s723 = sshll.u32 %s716, 4
          %s724 = int_to_ptr.vmem [resolvable:$true] %s723
          %726 = dma.hbm_to_vmem [thread:$0]  %s721, 16, %s724, %s714
        $region40: #{tpu_custom_call.1} parent=15 // pred_fallthru
          _
        // Predicated region
        $region41: #{tpu_custom_call.1} parent=15 // pred_check
          %p727 = pneg %p250
        $region42: #{tpu_custom_call.1} parent=15 // pred_check_branch
          %729 = sbr.rel (%p727) target = $region44
        $region43: #{tpu_custom_call.1} parent=15 // pred_region
          %s730 = sand.u32 %s62, 1
          %s731 = scalar_lea.sflag [#allocation12], %s730
          %s732 = sand.u32 %s240, 1
          %s733 = smul.addr %s732, 16
          %s734 = scalar_lea.vmem [#allocation13], %s733
          %s736 = ssub.s32 256, 256
          %737 = vsyncadd %s731, %s736
          %s738 = smul.addr %s70, 4
          %s739 = smul.addr %s738, 64
          %s740 = scalar_lea.hbm %s6, %s739
          %s741 = sshll.u32 %s734, 4
          %s742 = int_to_ptr.vmem [resolvable:$true] %s741
          %747 = dma.hbm_to_vmem [thread:$0]  %s740, 256, %s742, %s731, 64, 64, 4
        $region44: #{tpu_custom_call.1} parent=15 // pred_fallthru
          _
        // Predicated region
        $region45: #{tpu_custom_call.1} parent=15 // pred_check
          %p748 = pneg %p276
        $region46: #{tpu_custom_call.1} parent=15 // pred_check_branch
          %750 = sbr.rel (%p748) target = $region48
        $region47: #{tpu_custom_call.1} parent=15 // pred_region
          %s751 = sand.u32 %s62, 1
          %s752 = scalar_lea.sflag [#allocation15], %s751
          %s753 = sand.u32 %s266, 1
          %s754 = scalar_lea.vmem [#allocation14], %s753
          %s756 = ssub.s32 16, 16
          %757 = vsyncadd %s752, %s756
          %s758 = smul.addr %s70, 16
          %s759 = scalar_lea.hbm %s7, %s758
          %s761 = sshll.u32 %s754, 4
          %s762 = int_to_ptr.vmem [resolvable:$true] %s761
          %764 = dma.hbm_to_vmem [thread:$0]  %s759, 16, %s762, %s752
        $region48: #{tpu_custom_call.1} parent=15 // pred_fallthru
          _
        // Predicated region
        $region49: #{tpu_custom_call.1} parent=15 // pred_check
          %p765 = pneg %p302
        $region50: #{tpu_custom_call.1} parent=15 // pred_check_branch
          %767 = sbr.rel (%p765) target = $region52
        $region51: #{tpu_custom_call.1} parent=15 // pred_region
          %s768 = sand.u32 %s62, 1
          %s769 = scalar_lea.sflag [#allocation15], %s768
          %s770 = sand.u32 %s292, 1
          %s771 = smul.addr %s770, 16
          %s772 = scalar_lea.vmem [#allocation16], %s771
          %s774 = ssub.s32 256, 256
          %775 = vsyncadd %s769, %s774
          %s776 = smul.addr %s70, 4
          %s777 = smul.addr %s776, 64
          %s778 = scalar_lea.hbm %s8, %s777
          %s779 = sshll.u32 %s772, 4
          %s780 = int_to_ptr.vmem [resolvable:$true] %s779
          %785 = dma.hbm_to_vmem [thread:$0]  %s778, 256, %s780, %s769, 64, 64, 4
        $region52: #{tpu_custom_call.1} parent=15 // pred_fallthru
          _
        // Predicated region
        $region53: #{tpu_custom_call.1} parent=15 // pred_check
          %p786 = pneg %p328
        $region54: #{tpu_custom_call.1} parent=15 // pred_check_branch
          %788 = sbr.rel (%p786) target = $region56
        $region55: #{tpu_custom_call.1} parent=15 // pred_region
          %s789 = sand.u32 %s62, 1
          %s790 = scalar_lea.sflag [#allocation18], %s789
          %s791 = sand.u32 %s318, 1
          %s792 = scalar_lea.vmem [#allocation17], %s791
          %s794 = ssub.s32 16, 16
          %795 = vsyncadd %s790, %s794
          %s796 = smul.addr %s70, 16
          %s797 = scalar_lea.hbm %s9, %s796
          %s799 = sshll.u32 %s792, 4
          %s800 = int_to_ptr.vmem [resolvable:$true] %s799
          %802 = dma.hbm_to_vmem [thread:$0]  %s797, 16, %s800, %s790
        $region56: #{tpu_custom_call.1} parent=15 // pred_fallthru
          _
        // Predicated region
        $region57: #{tpu_custom_call.1} parent=15 // pred_check
          %p803 = pneg %p354
        $region58: #{tpu_custom_call.1} parent=15 // pred_check_branch
          %805 = sbr.rel (%p803) target = $region60
        $region59: #{tpu_custom_call.1} parent=15 // pred_region
          %s806 = sand.u32 %s62, 1
          %s807 = scalar_lea.sflag [#allocation18], %s806
          %s808 = sand.u32 %s344, 1
          %s809 = scalar_lea.vmem [#allocation19], %s808
          %s811 = ssub.s32 16, 16
          %812 = vsyncadd %s807, %s811
          %s813 = smul.addr %s70, 16
          %s814 = scalar_lea.hbm %s10, %s813
          %s816 = sshll.u32 %s809, 4
          %s817 = int_to_ptr.vmem [resolvable:$true] %s816
          %819 = dma.hbm_to_vmem [thread:$0]  %s814, 16, %s817, %s807
        $region60: #{tpu_custom_call.1} parent=15 // pred_fallthru
          _
        // Predicated region
        $region61: #{tpu_custom_call.1} parent=15 // pred_check
          %p820 = pneg %p380
        $region62: #{tpu_custom_call.1} parent=15 // pred_check_branch
          %822 = sbr.rel (%p820) target = $region64
        $region63: #{tpu_custom_call.1} parent=15 // pred_region
          %s823 = sand.u32 %s62, 1
          %s824 = scalar_lea.sflag [#allocation21], %s823
          %s825 = sand.u32 %s370, 1
          %s826 = scalar_lea.vmem [#allocation20], %s825
          %s828 = ssub.s32 16, 16
          %829 = vsyncadd %s824, %s828
          %s830 = smul.addr %s70, 16
          %s831 = scalar_lea.hbm %s11, %s830
          %s833 = sshll.u32 %s826, 4
          %s834 = int_to_ptr.vmem [resolvable:$true] %s833
          %836 = dma.hbm_to_vmem [thread:$0]  %s831, 16, %s834, %s824
        $region64: #{tpu_custom_call.1} parent=15 // pred_fallthru
          _
        // Predicated region
        $region65: #{tpu_custom_call.1} parent=15 // pred_check
          %p837 = pneg %p406
        $region66: #{tpu_custom_call.1} parent=15 // pred_check_branch
          %839 = sbr.rel (%p837) target = $region68
        $region67: #{tpu_custom_call.1} parent=15 // pred_region
          %s840 = sand.u32 %s62, 1
          %s841 = scalar_lea.sflag [#allocation21], %s840
          %s842 = sand.u32 %s396, 1
          %s843 = smul.addr %s842, 16
          %s844 = scalar_lea.vmem [#allocation22], %s843
          %s846 = ssub.s32 256, 256
          %847 = vsyncadd %s841, %s846
          %s848 = smul.addr %s70, 4
          %s849 = smul.addr %s848, 64
          %s850 = scalar_lea.hbm %s12, %s849
          %s851 = sshll.u32 %s844, 4
          %s852 = int_to_ptr.vmem [resolvable:$true] %s851
          %857 = dma.hbm_to_vmem [thread:$0]  %s850, 256, %s852, %s841, 64, 64, 4
        $region68: #{tpu_custom_call.1} parent=15 // pred_fallthru
          _
        // Predicated region
        $region69: #{tpu_custom_call.1} parent=15 // pred_check
          %p858 = pneg %p432
        $region70: #{tpu_custom_call.1} parent=15 // pred_check_branch
          %860 = sbr.rel (%p858) target = $region72
        $region71: #{tpu_custom_call.1} parent=15 // pred_region
          %s861 = sand.u32 %s62, 1
          %s862 = scalar_lea.sflag [#allocation24], %s861
          %s863 = sand.u32 %s422, 1
          %s864 = scalar_lea.vmem [#allocation23], %s863
          %s866 = ssub.s32 16, 16
          %867 = vsyncadd %s862, %s866
          %s868 = smul.addr %s70, 16
          %s869 = scalar_lea.hbm %s13, %s868
          %s871 = sshll.u32 %s864, 4
          %s872 = int_to_ptr.vmem [resolvable:$true] %s871
          %874 = dma.hbm_to_vmem [thread:$0]  %s869, 16, %s872, %s862
        $region72: #{tpu_custom_call.1} parent=15 // pred_fallthru
          _
        // Predicated region
        $region73: #{tpu_custom_call.1} parent=15 // pred_check
          %p875 = pneg %p458
        $region74: #{tpu_custom_call.1} parent=15 // pred_check_branch
          %877 = sbr.rel (%p875) target = $region76
        $region75: #{tpu_custom_call.1} parent=15 // pred_region
          %s878 = sand.u32 %s62, 1
          %s879 = scalar_lea.sflag [#allocation24], %s878
          %s880 = sand.u32 %s448, 1
          %s881 = smul.addr %s880, 32
          %s882 = scalar_lea.vmem [#allocation25], %s881
          %s884 = ssub.s32 512, 512
          %885 = vsyncadd %s879, %s884
          %s886 = smul.addr %s70, 8
          %s887 = smul.addr %s886, 64
          %s888 = scalar_lea.hbm %s14, %s887
          %s889 = sshll.u32 %s882, 4
          %s890 = int_to_ptr.vmem [resolvable:$true] %s889
          %895 = dma.hbm_to_vmem [thread:$0]  %s888, 512, %s890, %s879, 64, 64, 4
        $region76: #{tpu_custom_call.1} parent=15 // pred_fallthru
          _
        // Predicated region
        $region77: #{tpu_custom_call.1} parent=15 // pred_check
          %p896 = pneg %p484
        $region78: #{tpu_custom_call.1} parent=15 // pred_check_branch
          %898 = sbr.rel (%p896) target = $region80
        $region79: #{tpu_custom_call.1} parent=15 // pred_region
          %s899 = sand.u32 %s62, 1
          %s900 = scalar_lea.sflag [#allocation27], %s899
          %s901 = sand.u32 %s474, 1
          %s902 = scalar_lea.vmem [#allocation26], %s901
          %s904 = ssub.s32 16, 16
          %905 = vsyncadd %s900, %s904
          %s906 = smul.addr %s70, 16
          %s907 = scalar_lea.hbm %s15, %s906
          %s909 = sshll.u32 %s902, 4
          %s910 = int_to_ptr.vmem [resolvable:$true] %s909
          %912 = dma.hbm_to_vmem [thread:$0]  %s907, 16, %s910, %s900
        $region80: #{tpu_custom_call.1} parent=15 // pred_fallthru
          _
        // Predicated region
        $region81: #{tpu_custom_call.1} parent=15 // pred_check
          %p913 = pneg %p510
        $region82: #{tpu_custom_call.1} parent=15 // pred_check_branch
          %915 = sbr.rel (%p913) target = $region84
        $region83: #{tpu_custom_call.1} parent=15 // pred_region
          %s916 = sand.u32 %s62, 1
          %s917 = scalar_lea.sflag [#allocation27], %s916
          %s918 = sand.u32 %s500, 1
          %s919 = scalar_lea.vmem [#allocation28], %s918
          %s921 = ssub.s32 16, 16
          %922 = vsyncadd %s917, %s921
          %s923 = smul.addr %s70, 16
          %s924 = scalar_lea.hbm %s16, %s923
          %s926 = sshll.u32 %s919, 4
          %s927 = int_to_ptr.vmem [resolvable:$true] %s926
          %929 = dma.hbm_to_vmem [thread:$0]  %s924, 16, %s927, %s917
        $region84: #{tpu_custom_call.1} parent=15 // pred_fallthru
          _
        // Predicated region
        $region85: #{tpu_custom_call.1} parent=15 // pred_check
          %p930 = pneg %p536
        $region86: #{tpu_custom_call.1} parent=15 // pred_check_branch
          %932 = sbr.rel (%p930) target = $region88
        $region87: #{tpu_custom_call.1} parent=15 // pred_region
          %s933 = sand.u32 %s526, 1
          %s934 = scalar_lea.sflag [#allocation30], %s933
          %s935 = sand.u32 %s526, 1
          %s936 = scalar_lea.vmem [#allocation29], %s935
          %s938 = ssub.s32 16, 16
          %939 = vsyncadd %s934, %s938
          %s940 = smul.addr %s70, 16
          %s941 = scalar_lea.hbm %s17, %s940
          %s943 = sshll.u32 %s936, 4
          %s944 = int_to_ptr.vmem [resolvable:$true] %s943
          %946 = dma.hbm_to_vmem [thread:$0]  %s941, 16, %s944, %s934
        $region88: #{tpu_custom_call.1} parent=15 // pred_fallthru
          _
      $region16: #{tpu_custom_call.1} parent=5 // pred_fallthru
        _
      %p947 = scmp.le.s32.totalorder 1, %s62
      %p948 = scmp.lt.s32.totalorder %s62, 5
      %p949 = pnand %p947, %p948
      %p950 = pneg %p949
      // Predicated region
      $region89: #{tpu_custom_call.1} parent=5 // pred_check
        _
      $region90: #{tpu_custom_call.1} parent=5 // pred_check_branch
        %952 = sbr.rel (%p949) target = $region92
      $region91: #{tpu_custom_call.1} parent=5 // pred_region
        %s953 = ssub.s32 %s62, 1
        %s954 = sand.u32 %s87, 1
        %s955 = scalar_lea.sflag [#allocation3], %s954
        %s956 = sand.u32 %s87, 1
        %s957 = smul.addr %s956, 8
        %s958 = scalar_lea.vmem [#allocation2], %s957
        // Predicated region
        $region93: #{tpu_custom_call.1} parent=91 // pred_check
          %p959 = pneg %p100
        $region94: #{tpu_custom_call.1} parent=91 // pred_check_branch
          %961 = sbr.rel (%p959) target = $region96
        $region95: #{tpu_custom_call.1} parent=91 // pred_region
          %962 = dma.done %s955, 128
        $region96: #{tpu_custom_call.1} parent=91 // pred_fallthru
          _
        %s963 = sand.u32 %s67, 1
        %s964 = scalar_lea.sflag [#allocation6], %s963
        %s965 = sand.u32 %s113, 1
        %s966 = smul.addr %s965, 4
        %s967 = scalar_lea.vmem [#allocation5], %s966
        // Predicated region
        $region97: #{tpu_custom_call.1} parent=91 // pred_check
          %p968 = pneg %p126
        $region98: #{tpu_custom_call.1} parent=91 // pred_check_branch
          %970 = sbr.rel (%p968) target = $region100
        $region99: #{tpu_custom_call.1} parent=91 // pred_region
          %971 = dma.done %s964, 64
        $region100: #{tpu_custom_call.1} parent=91 // pred_fallthru
          _
        %s972 = sand.u32 %s67, 1
        %s973 = scalar_lea.sflag [#allocation6], %s972
        %s974 = sand.u32 %s139, 1
        %s975 = smul.addr %s974, 16
        %s976 = scalar_lea.vmem [#allocation7], %s975
        // Predicated region
        $region101: #{tpu_custom_call.1} parent=91 // pred_check
          %p977 = pneg %p152
        $region102: #{tpu_custom_call.1} parent=91 // pred_check_branch
          %979 = sbr.rel (%p977) target = $region104
        $region103: #{tpu_custom_call.1} parent=91 // pred_region
          %980 = dma.done %s973, 256
        $region104: #{tpu_custom_call.1} parent=91 // pred_fallthru
          _
        %s981 = sand.u32 %s67, 1
        %s982 = scalar_lea.sflag [#allocation9], %s981
        %s983 = sand.u32 %s165, 1
        %s984 = scalar_lea.vmem [#allocation8], %s983
        // Predicated region
        $region105: #{tpu_custom_call.1} parent=91 // pred_check
          %p985 = pneg %p178
        $region106: #{tpu_custom_call.1} parent=91 // pred_check_branch
          %987 = sbr.rel (%p985) target = $region108
        $region107: #{tpu_custom_call.1} parent=91 // pred_region
          %988 = dma.done %s982, 16
        $region108: #{tpu_custom_call.1} parent=91 // pred_fallthru
          _
        %s989 = sand.u32 %s67, 1
        %s990 = scalar_lea.sflag [#allocation9], %s989
        %s991 = sand.u32 %s191, 1
        %s992 = smul.addr %s991, 16
        %s993 = scalar_lea.vmem [#allocation10], %s992
        // Predicated region
        $region109: #{tpu_custom_call.1} parent=91 // pred_check
          %p994 = pneg %p204
        $region110: #{tpu_custom_call.1} parent=91 // pred_check_branch
          %996 = sbr.rel (%p994) target = $region112
        $region111: #{tpu_custom_call.1} parent=91 // pred_region
          %997 = dma.done %s990, 256
        $region112: #{tpu_custom_call.1} parent=91 // pred_fallthru
          _
        %s998 = sand.u32 %s67, 1
        %s999 = scalar_lea.sflag [#allocation12], %s998
        %s1000 = sand.u32 %s217, 1
        %s1001 = scalar_lea.vmem [#allocation11], %s1000
        // Predicated region
        $region113: #{tpu_custom_call.1} parent=91 // pred_check
          %p1002 = pneg %p230
        $region114: #{tpu_custom_call.1} parent=91 // pred_check_branch
          %1004 = sbr.rel (%p1002) target = $region116
        $region115: #{tpu_custom_call.1} parent=91 // pred_region
          %1005 = dma.done %s999, 16
        $region116: #{tpu_custom_call.1} parent=91 // pred_fallthru
          _
        %s1006 = sand.u32 %s67, 1
        %s1007 = scalar_lea.sflag [#allocation12], %s1006
        %s1008 = sand.u32 %s243, 1
        %s1009 = smul.addr %s1008, 16
        %s1010 = scalar_lea.vmem [#allocation13], %s1009
        // Predicated region
        $region117: #{tpu_custom_call.1} parent=91 // pred_check
          %p1011 = pneg %p256
        $region118: #{tpu_custom_call.1} parent=91 // pred_check_branch
          %1013 = sbr.rel (%p1011) target = $region120
        $region119: #{tpu_custom_call.1} parent=91 // pred_region
          %1014 = dma.done %s1007, 256
        $region120: #{tpu_custom_call.1} parent=91 // pred_fallthru
          _
        %s1015 = sand.u32 %s67, 1
        %s1016 = scalar_lea.sflag [#allocation15], %s1015
        %s1017 = sand.u32 %s269, 1
        %s1018 = scalar_lea.vmem [#allocation14], %s1017
        // Predicated region
        $region121: #{tpu_custom_call.1} parent=91 // pred_check
          %p1019 = pneg %p282
        $region122: #{tpu_custom_call.1} parent=91 // pred_check_branch
          %1021 = sbr.rel (%p1019) target = $region124
        $region123: #{tpu_custom_call.1} parent=91 // pred_region
          %1022 = dma.done %s1016, 16
        $region124: #{tpu_custom_call.1} parent=91 // pred_fallthru
          _
        %s1023 = sand.u32 %s67, 1
        %s1024 = scalar_lea.sflag [#allocation15], %s1023
        %s1025 = sand.u32 %s295, 1
        %s1026 = smul.addr %s1025, 16
        %s1027 = scalar_lea.vmem [#allocation16], %s1026
        // Predicated region
        $region125: #{tpu_custom_call.1} parent=91 // pred_check
          %p1028 = pneg %p308
        $region126: #{tpu_custom_call.1} parent=91 // pred_check_branch
          %1030 = sbr.rel (%p1028) target = $region128
        $region127: #{tpu_custom_call.1} parent=91 // pred_region
          %1031 = dma.done %s1024, 256
        $region128: #{tpu_custom_call.1} parent=91 // pred_fallthru
          _
        %s1032 = sand.u32 %s67, 1
        %s1033 = scalar_lea.sflag [#allocation18], %s1032
        %s1034 = sand.u32 %s321, 1
        %s1035 = scalar_lea.vmem [#allocation17], %s1034
        // Predicated region
        $region129: #{tpu_custom_call.1} parent=91 // pred_check
          %p1036 = pneg %p334
        $region130: #{tpu_custom_call.1} parent=91 // pred_check_branch
          %1038 = sbr.rel (%p1036) target = $region132
        $region131: #{tpu_custom_call.1} parent=91 // pred_region
          %1039 = dma.done %s1033, 16
        $region132: #{tpu_custom_call.1} parent=91 // pred_fallthru
          _
        %s1040 = sand.u32 %s67, 1
        %s1041 = scalar_lea.sflag [#allocation18], %s1040
        %s1042 = sand.u32 %s347, 1
        %s1043 = scalar_lea.vmem [#allocation19], %s1042
        // Predicated region
        $region133: #{tpu_custom_call.1} parent=91 // pred_check
          %p1044 = pneg %p360
        $region134: #{tpu_custom_call.1} parent=91 // pred_check_branch
          %1046 = sbr.rel (%p1044) target = $region136
        $region135: #{tpu_custom_call.1} parent=91 // pred_region
          %1047 = dma.done %s1041, 16
        $region136: #{tpu_custom_call.1} parent=91 // pred_fallthru
          _
        %s1048 = sand.u32 %s67, 1
        %s1049 = scalar_lea.sflag [#allocation21], %s1048
        %s1050 = sand.u32 %s373, 1
        %s1051 = scalar_lea.vmem [#allocation20], %s1050
        // Predicated region
        $region137: #{tpu_custom_call.1} parent=91 // pred_check
          %p1052 = pneg %p386
        $region138: #{tpu_custom_call.1} parent=91 // pred_check_branch
          %1054 = sbr.rel (%p1052) target = $region140
        $region139: #{tpu_custom_call.1} parent=91 // pred_region
          %1055 = dma.done %s1049, 16
        $region140: #{tpu_custom_call.1} parent=91 // pred_fallthru
          _
        %s1056 = sand.u32 %s67, 1
        %s1057 = scalar_lea.sflag [#allocation21], %s1056
        %s1058 = sand.u32 %s399, 1
        %s1059 = smul.addr %s1058, 16
        %s1060 = scalar_lea.vmem [#allocation22], %s1059
        // Predicated region
        $region141: #{tpu_custom_call.1} parent=91 // pred_check
          %p1061 = pneg %p412
        $region142: #{tpu_custom_call.1} parent=91 // pred_check_branch
          %1063 = sbr.rel (%p1061) target = $region144
        $region143: #{tpu_custom_call.1} parent=91 // pred_region
          %1064 = dma.done %s1057, 256
        $region144: #{tpu_custom_call.1} parent=91 // pred_fallthru
          _
        %s1065 = sand.u32 %s67, 1
        %s1066 = scalar_lea.sflag [#allocation24], %s1065
        %s1067 = sand.u32 %s425, 1
        %s1068 = scalar_lea.vmem [#allocation23], %s1067
        // Predicated region
        $region145: #{tpu_custom_call.1} parent=91 // pred_check
          %p1069 = pneg %p438
        $region146: #{tpu_custom_call.1} parent=91 // pred_check_branch
          %1071 = sbr.rel (%p1069) target = $region148
        $region147: #{tpu_custom_call.1} parent=91 // pred_region
          %1072 = dma.done %s1066, 16
        $region148: #{tpu_custom_call.1} parent=91 // pred_fallthru
          _
        %s1073 = sand.u32 %s67, 1
        %s1074 = scalar_lea.sflag [#allocation24], %s1073
        %s1075 = sand.u32 %s451, 1
        %s1076 = smul.addr %s1075, 32
        %s1077 = scalar_lea.vmem [#allocation25], %s1076
        // Predicated region
        $region149: #{tpu_custom_call.1} parent=91 // pred_check
          %p1078 = pneg %p464
        $region150: #{tpu_custom_call.1} parent=91 // pred_check_branch
          %1080 = sbr.rel (%p1078) target = $region152
        $region151: #{tpu_custom_call.1} parent=91 // pred_region
          %1081 = dma.done %s1074, 512
        $region152: #{tpu_custom_call.1} parent=91 // pred_fallthru
          _
        %s1082 = sand.u32 %s67, 1
        %s1083 = scalar_lea.sflag [#allocation27], %s1082
        %s1084 = sand.u32 %s477, 1
        %s1085 = scalar_lea.vmem [#allocation26], %s1084
        // Predicated region
        $region153: #{tpu_custom_call.1} parent=91 // pred_check
          %p1086 = pneg %p490
        $region154: #{tpu_custom_call.1} parent=91 // pred_check_branch
          %1088 = sbr.rel (%p1086) target = $region156
        $region155: #{tpu_custom_call.1} parent=91 // pred_region
          %1089 = dma.done %s1083, 16
        $region156: #{tpu_custom_call.1} parent=91 // pred_fallthru
          _
        %s1090 = sand.u32 %s67, 1
        %s1091 = scalar_lea.sflag [#allocation27], %s1090
        %s1092 = sand.u32 %s503, 1
        %s1093 = scalar_lea.vmem [#allocation28], %s1092
        // Predicated region
        $region157: #{tpu_custom_call.1} parent=91 // pred_check
          %p1094 = pneg %p516
        $region158: #{tpu_custom_call.1} parent=91 // pred_check_branch
          %1096 = sbr.rel (%p1094) target = $region160
        $region159: #{tpu_custom_call.1} parent=91 // pred_region
          %1097 = dma.done %s1091, 16
        $region160: #{tpu_custom_call.1} parent=91 // pred_fallthru
          _
        %s1098 = sand.u32 %s529, 1
        %s1099 = scalar_lea.sflag [#allocation30], %s1098
        %s1100 = sand.u32 %s529, 1
        %s1101 = scalar_lea.vmem [#allocation29], %s1100
        // Predicated region
        $region161: #{tpu_custom_call.1} parent=91 // pred_check
          %p1102 = pneg %p542
        $region162: #{tpu_custom_call.1} parent=91 // pred_check_branch
          %1104 = sbr.rel (%p1102) target = $region164
        $region163: #{tpu_custom_call.1} parent=91 // pred_region
          %1105 = dma.done %s1099, 16
        $region164: #{tpu_custom_call.1} parent=91 // pred_fallthru
          _
        %s1106 = sand.u32 %s87, 1
        %s1107 = scalar_lea.sflag [#allocation3], %s1106
        %s1108 = sand.u32 %s87, 1
        %s1109 = smul.addr %s1108, 8
        %s1110 = scalar_lea.vmem [#allocation2], %s1109
        %p1111 = pneg %p100
        %p1112 = pneg %p97
        %s1113 = sand.u32 %s67, 1
        %s1114 = scalar_lea.sflag [#allocation6], %s1113
        %s1115 = sand.u32 %s113, 1
        %s1116 = smul.addr %s1115, 4
        %s1117 = scalar_lea.vmem [#allocation5], %s1116
        %p1118 = pneg %p126
        %p1119 = pneg %p123
        %s1120 = sand.u32 %s67, 1
        %s1121 = scalar_lea.sflag [#allocation6], %s1120
        %s1122 = sand.u32 %s139, 1
        %s1123 = smul.addr %s1122, 16
        %s1124 = scalar_lea.vmem [#allocation7], %s1123
        %p1125 = pneg %p152
        %p1126 = pneg %p149
        %s1127 = sand.u32 %s67, 1
        %s1128 = scalar_lea.sflag [#allocation9], %s1127
        %s1129 = sand.u32 %s165, 1
        %s1130 = scalar_lea.vmem [#allocation8], %s1129
        %p1131 = pneg %p178
        %p1132 = pneg %p175
        %s1133 = sand.u32 %s67, 1
        %s1134 = scalar_lea.sflag [#allocation9], %s1133
        %s1135 = sand.u32 %s191, 1
        %s1136 = smul.addr %s1135, 16
        %s1137 = scalar_lea.vmem [#allocation10], %s1136
        %p1138 = pneg %p204
        %p1139 = pneg %p201
        %s1140 = sand.u32 %s67, 1
        %s1141 = scalar_lea.sflag [#allocation12], %s1140
        %s1142 = sand.u32 %s217, 1
        %s1143 = scalar_lea.vmem [#allocation11], %s1142
        %p1144 = pneg %p230
        %p1145 = pneg %p227
        %s1146 = sand.u32 %s67, 1
        %s1147 = scalar_lea.sflag [#allocation12], %s1146
        %s1148 = sand.u32 %s243, 1
        %s1149 = smul.addr %s1148, 16
        %s1150 = scalar_lea.vmem [#allocation13], %s1149
        %p1151 = pneg %p256
        %p1152 = pneg %p253
        %s1153 = sand.u32 %s67, 1
        %s1154 = scalar_lea.sflag [#allocation15], %s1153
        %s1155 = sand.u32 %s269, 1
        %s1156 = scalar_lea.vmem [#allocation14], %s1155
        %p1157 = pneg %p282
        %p1158 = pneg %p279
        %s1159 = sand.u32 %s67, 1
        %s1160 = scalar_lea.sflag [#allocation15], %s1159
        %s1161 = sand.u32 %s295, 1
        %s1162 = smul.addr %s1161, 16
        %s1163 = scalar_lea.vmem [#allocation16], %s1162
        %p1164 = pneg %p308
        %p1165 = pneg %p305
        %s1166 = sand.u32 %s67, 1
        %s1167 = scalar_lea.sflag [#allocation18], %s1166
        %s1168 = sand.u32 %s321, 1
        %s1169 = scalar_lea.vmem [#allocation17], %s1168
        %p1170 = pneg %p334
        %p1171 = pneg %p331
        %s1172 = sand.u32 %s67, 1
        %s1173 = scalar_lea.sflag [#allocation18], %s1172
        %s1174 = sand.u32 %s347, 1
        %s1175 = scalar_lea.vmem [#allocation19], %s1174
        %p1176 = pneg %p360
        %p1177 = pneg %p357
        %s1178 = sand.u32 %s67, 1
        %s1179 = scalar_lea.sflag [#allocation21], %s1178
        %s1180 = sand.u32 %s373, 1
        %s1181 = scalar_lea.vmem [#allocation20], %s1180
        %p1182 = pneg %p386
        %p1183 = pneg %p383
        %s1184 = sand.u32 %s67, 1
        %s1185 = scalar_lea.sflag [#allocation21], %s1184
        %s1186 = sand.u32 %s399, 1
        %s1187 = smul.addr %s1186, 16
        %s1188 = scalar_lea.vmem [#allocation22], %s1187
        %p1189 = pneg %p412
        %p1190 = pneg %p409
        %s1191 = sand.u32 %s67, 1
        %s1192 = scalar_lea.sflag [#allocation24], %s1191
        %s1193 = sand.u32 %s425, 1
        %s1194 = scalar_lea.vmem [#allocation23], %s1193
        %p1195 = pneg %p438
        %p1196 = pneg %p435
        %s1197 = sand.u32 %s67, 1
        %s1198 = scalar_lea.sflag [#allocation24], %s1197
        %s1199 = sand.u32 %s451, 1
        %s1200 = smul.addr %s1199, 32
        %s1201 = scalar_lea.vmem [#allocation25], %s1200
        %p1202 = pneg %p464
        %p1203 = pneg %p461
        %s1204 = sand.u32 %s67, 1
        %s1205 = scalar_lea.sflag [#allocation27], %s1204
        %s1206 = sand.u32 %s477, 1
        %s1207 = scalar_lea.vmem [#allocation26], %s1206
        %p1208 = pneg %p490
        %p1209 = pneg %p487
        %s1210 = sand.u32 %s67, 1
        %s1211 = scalar_lea.sflag [#allocation27], %s1210
        %s1212 = sand.u32 %s503, 1
        %s1213 = scalar_lea.vmem [#allocation28], %s1212
        %p1214 = pneg %p516
        %p1215 = pneg %p513
        %s1216 = sand.u32 %s529, 1
        %s1217 = scalar_lea.sflag [#allocation30], %s1216
        %s1218 = sand.u32 %s529, 1
        %s1219 = scalar_lea.vmem [#allocation29], %s1218
        %p1220 = pneg %p542
        %p1221 = pneg %p539
        %p1222 = pneg %p568
        %p1223 = pneg %p565
        %s1224 = sand.u32 %s555, 1
        %s1225 = scalar_lea.sflag [#allocation4], %s1224
        %s1226 = sand.u32 %s555, 1
        %s1227 = smul.addr %s1226, 8
        %s1228 = scalar_lea.vmem [#allocation31], %s1227
        %p1229 = pneg %p596
        %p1230 = pneg %p593
        %s1231 = sand.u32 %s583, 1
        %s1232 = scalar_lea.sflag [#allocation33], %s1231
        %s1233 = sand.u32 %s583, 1
        %s1234 = smul.addr %s1233, 8
        %s1235 = scalar_lea.vmem [#allocation32], %s1234
        %p1237 = scmp.eq.s32.totalorder %s72, 0
        // Predicated region
        $region165: #{tpu_custom_call.1} parent=91 // pred_check
          %p1238 = pneg %p1237
        $region166: #{tpu_custom_call.1} parent=91 // pred_check_branch
          %1240 = sbr.rel (%p1238) target = $region168
        $region167: #{tpu_custom_call.1} parent=91 // pred_region
          %v1241 = vld [vmem:[%s958] sm:$0xff]
          %vm1242 = vcmask 261120
          %1243 = vst.msk [vmem:[%s1228] sm:$0xff] %vm1242, %v1241
        $region168: #{tpu_custom_call.1} parent=91 // pred_fallthru
          _
        %v1244 = vld [vmem:[%s1228] sm:$0xff]
        %v1245 = vld [vmem:[%s967] sm:$0xf]
        %v1246 = vunpack.c.l.bf16 %v1245
        %v1247 = vadd.f32 %v1244, %v1246
        %v1248 = vpack.c.bf16 %v1247, %v1247
        %v1249 = vpack.c.bf16 %v1244, %v1244
        %v1250 = vld [vmem:[%s976] sm:$0xf]
        %v1251 = vld [vmem:[%s976 + $0x4] sm:$0xf]
        %v1252 = vld [vmem:[%s976 + $0x8] sm:$0xf]
        %v1253 = vld [vmem:[%s976 + $0xc] sm:$0xf]
        %v1254 = vld [vmem:[%s984] sm:$0x1]
        %v1256 = vlaneseq
        %v1257 = vshrl.u32 %v1256, 7
        %v1258 = vsub.s32 0, %v1257
        %v1259 = vrot.slane %v1254, %v1258
        %v1265 = vunpack.c.l.b16 %v1250
        %v1266 = vunpack.c.l.b16 %v1251
        %v1267 = vunpack.c.l.b16 %v1252
        %v1268 = vunpack.c.l.b16 %v1253
        %v1269 = vpack.c.b16 %v1266, %v1265
        %v1270 = vpack.c.b16 %v1268, %v1267
        %vm1273 = vcmask 261120
        %v1275 = vsel %vm1273, %v1248, 0
        %1277 = vmatprep.subr.bf16.mxu0 0
        %1278 = vmatpush1.bf16.msra.mxu0 %v1269
        %1279 = vmatprep.subr.bf16.mxu0 0
        %1280 = vmatpush1.bf16.msra.mxu0 %v1270
        %1281 = vmatprep.subr.bf16.mxu0 0
        %1282 = vmatpush1.bf16.msra.mxu0 0
        %1283 = vmatprep.subr.bf16.mxu0 0
        %1284 = vmatpush1.bf16.msra.mxu0 0
        %1285 = vmatprep.subr.bf16.mxu0 0
        %1286 = vmatpush1.bf16.msra.mxu0 0
        %1287 = vmatprep.subr.bf16.mxu0 0
        %1288 = vmatpush1.bf16.msra.mxu0 0
        %1289 = vmatprep.subr.bf16.mxu0 0
        %1290 = vmatpush1.bf16.msra.mxu0 0
        %1291 = vmatprep.subr.bf16.mxu0 0
        %1292 = vmatpush1.bf16.msra.mxu0 0
        %1293 = vmatprep.subr.bf16.mxu0 0
        %1294 = vmatpush1.bf16.msra.mxu0 0
        %1295 = vmatprep.subr.bf16.mxu0 0
        %1296 = vmatpush1.bf16.msra.mxu0 0
        %1297 = vmatprep.subr.bf16.mxu0 0
        %1298 = vmatpush1.bf16.msra.mxu0 0
        %1299 = vmatprep.subr.bf16.mxu0 0
        %1300 = vmatpush1.bf16.msra.mxu0 0
        %1301 = vmatprep.subr.bf16.mxu0 0
        %1302 = vmatpush1.bf16.msra.mxu0 0
        %1303 = vmatprep.subr.bf16.mxu0 0
        %1304 = vmatpush1.bf16.msra.mxu0 0
        %1305 = vmatprep.subr.bf16.mxu0 0
        %1306 = vmatpush1.bf16.msra.mxu0 0
        %1307 = vmatprep.subr.bf16.mxu0 0
        %1308 = vmatpush1.bf16.msra.mxu0 0
        %1309 = vmatprep.mubr.bf16.mxu0 0
        %1310 = vmatmul.mubr.bf16.gmra.mrb[0].mxu0 %v1275
        %v1311 = vpop.f32.mrb[0].mxu0
        %v1312 = vadd.f32 %v1259, %v1311
        %v1313 = vpop.f32.mrb[0].mxu0
        %v1314 = vpop.f32.mrb[0].mxu0
        %v1315 = vpop.f32.mrb[0].mxu0
        %1316 = vdwg.mxu0
        %v1317 = vld [vmem:[%s993] sm:$0xf]
        %v1318 = vld [vmem:[%s993 + $0x4] sm:$0xf]
        %v1319 = vld [vmem:[%s993 + $0x8] sm:$0xf]
        %v1320 = vld [vmem:[%s993 + $0xc] sm:$0xf]
        %v1321 = vld [vmem:[%s1001] sm:$0x1]
        %v1323 = vlaneseq
        %v1324 = vshrl.u32 %v1323, 7
        %v1325 = vsub.s32 0, %v1324
        %v1326 = vrot.slane %v1321, %v1325
        %v1332 = vunpack.c.l.b16 %v1317
        %v1333 = vunpack.c.l.b16 %v1318
        %v1334 = vunpack.c.l.b16 %v1319
        %v1335 = vunpack.c.l.b16 %v1320
        %v1336 = vpack.c.b16 %v1333, %v1332
        %v1337 = vpack.c.b16 %v1335, %v1334
        %1340 = vmatprep.subr.bf16.mxu0 0
        %1341 = vmatpush1.bf16.msra.mxu0 %v1336
        %1342 = vmatprep.subr.bf16.mxu0 0
        %1343 = vmatpush1.bf16.msra.mxu0 %v1337
        %1344 = vmatprep.subr.bf16.mxu0 0
        %1345 = vmatpush1.bf16.msra.mxu0 0
        %1346 = vmatprep.subr.bf16.mxu0 0
        %1347 = vmatpush1.bf16.msra.mxu0 0
        %1348 = vmatprep.subr.bf16.mxu0 0
        %1349 = vmatpush1.bf16.msra.mxu0 0
        %1350 = vmatprep.subr.bf16.mxu0 0
        %1351 = vmatpush1.bf16.msra.mxu0 0
        %1352 = vmatprep.subr.bf16.mxu0 0
        %1353 = vmatpush1.bf16.msra.mxu0 0
        %1354 = vmatprep.subr.bf16.mxu0 0
        %1355 = vmatpush1.bf16.msra.mxu0 0
        %1356 = vmatprep.subr.bf16.mxu0 0
        %1357 = vmatpush1.bf16.msra.mxu0 0
        %1358 = vmatprep.subr.bf16.mxu0 0
        %1359 = vmatpush1.bf16.msra.mxu0 0
        %1360 = vmatprep.subr.bf16.mxu0 0
        %1361 = vmatpush1.bf16.msra.mxu0 0
        %1362 = vmatprep.subr.bf16.mxu0 0
        %1363 = vmatpush1.bf16.msra.mxu0 0
        %1364 = vmatprep.subr.bf16.mxu0 0
        %1365 = vmatpush1.bf16.msra.mxu0 0
        %1366 = vmatprep.subr.bf16.mxu0 0
        %1367 = vmatpush1.bf16.msra.mxu0 0
        %1368 = vmatprep.subr.bf16.mxu0 0
        %1369 = vmatpush1.bf16.msra.mxu0 0
        %1370 = vmatprep.subr.bf16.mxu0 0
        %1371 = vmatpush1.bf16.msra.mxu0 0
        %1372 = vmatprep.mubr.bf16.mxu0 0
        %1373 = vmatmul.mubr.bf16.gmra.mrb[0].mxu0 %v1275
        %v1374 = vpop.f32.mrb[0].mxu0
        %v1375 = vadd.f32 %v1326, %v1374
        %v1376 = vpop.f32.mrb[0].mxu0
        %v1377 = vpop.f32.mrb[0].mxu0
        %v1378 = vpop.f32.mrb[0].mxu0
        %1379 = vdwg.mxu0
        %v1380 = vld [vmem:[%s1010] sm:$0xf]
        %v1381 = vld [vmem:[%s1010 + $0x4] sm:$0xf]
        %v1382 = vld [vmem:[%s1010 + $0x8] sm:$0xf]
        %v1383 = vld [vmem:[%s1010 + $0xc] sm:$0xf]
        %v1384 = vld [vmem:[%s1018] sm:$0x1]
        %v1386 = vlaneseq
        %v1387 = vshrl.u32 %v1386, 7
        %v1388 = vsub.s32 0, %v1387
        %v1389 = vrot.slane %v1384, %v1388
        %v1395 = vunpack.c.l.b16 %v1380
        %v1396 = vunpack.c.l.b16 %v1381
        %v1397 = vunpack.c.l.b16 %v1382
        %v1398 = vunpack.c.l.b16 %v1383
        %v1399 = vpack.c.b16 %v1396, %v1395
        %v1400 = vpack.c.b16 %v1398, %v1397
        %v1404 = vsel %vm1273, %v1249, 0
        %1406 = vmatprep.subr.bf16.mxu0 0
        %1407 = vmatpush1.bf16.msra.mxu0 %v1399
        %1408 = vmatprep.subr.bf16.mxu0 0
        %1409 = vmatpush1.bf16.msra.mxu0 %v1400
        %1410 = vmatprep.subr.bf16.mxu0 0
        %1411 = vmatpush1.bf16.msra.mxu0 0
        %1412 = vmatprep.subr.bf16.mxu0 0
        %1413 = vmatpush1.bf16.msra.mxu0 0
        %1414 = vmatprep.subr.bf16.mxu0 0
        %1415 = vmatpush1.bf16.msra.mxu0 0
        %1416 = vmatprep.subr.bf16.mxu0 0
        %1417 = vmatpush1.bf16.msra.mxu0 0
        %1418 = vmatprep.subr.bf16.mxu0 0
        %1419 = vmatpush1.bf16.msra.mxu0 0
        %1420 = vmatprep.subr.bf16.mxu0 0
        %1421 = vmatpush1.bf16.msra.mxu0 0
        %1422 = vmatprep.subr.bf16.mxu0 0
        %1423 = vmatpush1.bf16.msra.mxu0 0
        %1424 = vmatprep.subr.bf16.mxu0 0
        %1425 = vmatpush1.bf16.msra.mxu0 0
        %1426 = vmatprep.subr.bf16.mxu0 0
        %1427 = vmatpush1.bf16.msra.mxu0 0
        %1428 = vmatprep.subr.bf16.mxu0 0
        %1429 = vmatpush1.bf16.msra.mxu0 0
        %1430 = vmatprep.subr.bf16.mxu0 0
        %1431 = vmatpush1.bf16.msra.mxu0 0
        %1432 = vmatprep.subr.bf16.mxu0 0
        %1433 = vmatpush1.bf16.msra.mxu0 0
        %1434 = vmatprep.subr.bf16.mxu0 0
        %1435 = vmatpush1.bf16.msra.mxu0 0
        %1436 = vmatprep.subr.bf16.mxu0 0
        %1437 = vmatpush1.bf16.msra.mxu0 0
        %1438 = vmatprep.mubr.bf16.mxu0 0
        %1439 = vmatmul.mubr.bf16.gmra.mrb[0].mxu0 %v1404
        %v1440 = vpop.f32.mrb[0].mxu0
        %v1441 = vadd.f32 %v1389, %v1440
        %v1442 = vpop.f32.mrb[0].mxu0
        %v1443 = vpop.f32.mrb[0].mxu0
        %v1444 = vpop.f32.mrb[0].mxu0
        %1445 = vdwg.mxu0
        %v1446 = vpack.c.bf16 %v1312, %v1312
        %v1447 = vpack.c.bf16 %v1375, %v1375
        %v1448 = vpack.c.bf16 %v1441, %v1441
        %vm1449 = vcmask 64512
        %v1451 = vsel %vm1449, %v1446, 0
        %v1454 = vsel %vm1449, %v1447, 0
        %1456 = vmatprep.subr.bf16.mxu0 0
        %1457 = vmatpush1.bf16.xpose.msra.mxu0 %v1454
        %1458 = vmatprep.subr.bf16.mxu0 0
        %1459 = vmatpush1.bf16.xpose.msra.mxu0 0
        %1460 = vmatprep.subr.bf16.mxu0 0
        %1461 = vmatpush1.bf16.xpose.msra.mxu0 0
        %1462 = vmatprep.subr.bf16.mxu0 0
        %1463 = vmatpush1.bf16.xpose.msra.mxu0 0
        %1464 = vmatprep.subr.bf16.mxu0 0
        %1465 = vmatpush1.bf16.xpose.msra.mxu0 0
        %1466 = vmatprep.subr.bf16.mxu0 0
        %1467 = vmatpush1.bf16.xpose.msra.mxu0 0
        %1468 = vmatprep.subr.bf16.mxu0 0
        %1469 = vmatpush1.bf16.xpose.msra.mxu0 0
        %1470 = vmatprep.subr.bf16.mxu0 0
        %1471 = vmatpush1.bf16.xpose.msra.mxu0 0
        %1472 = vmatprep.subr.bf16.mxu0 0
        %1473 = vmatpush1.bf16.xpose.msra.mxu0 0
        %1474 = vmatprep.subr.bf16.mxu0 0
        %1475 = vmatpush1.bf16.xpose.msra.mxu0 0
        %1476 = vmatprep.subr.bf16.mxu0 0
        %1477 = vmatpush1.bf16.xpose.msra.mxu0 0
        %1478 = vmatprep.subr.bf16.mxu0 0
        %1479 = vmatpush1.bf16.xpose.msra.mxu0 0
        %1480 = vmatprep.subr.bf16.mxu0 0
        %1481 = vmatpush1.bf16.xpose.msra.mxu0 0
        %1482 = vmatprep.subr.bf16.mxu0 0
        %1483 = vmatpush1.bf16.xpose.msra.mxu0 0
        %1484 = vmatprep.subr.bf16.mxu0 0
        %1485 = vmatpush1.bf16.xpose.msra.mxu0 0
        %1486 = vmatprep.subr.bf16.mxu0 0
        %1487 = vmatpush1.bf16.xpose.msra.mxu0 0
        %1488 = vmatprep.mubr.bf16.mxu0 0
        %1489 = vmatmul.mubr.bf16.gmra.mrb[0].mxu0 %v1451
        %v1490 = vpop.f32.mrb[0].mxu0
        %v1491 = vadd.f32 0.0, %v1490
        %v1492 = vpop.f32.mrb[0].mxu0
        %v1493 = vpop.f32.mrb[0].mxu0
        %v1494 = vpop.f32.mrb[0].mxu0
        %1495 = vdwg.mxu0
        %v1496 = vsel %vm1449, %v1491, -inf
        %1497 = vmax.xlane.f32.xlu0 %v1496
        %v1498 = vpop.xlane.xlu0 %1497
        %v1499 = vsub.f32 %v1491, %v1498
        %v1500 = vmul.f32 %v1499, 1.442695
        %v1501 = vpow.pop %v1500
        %v1502 = vsel %vm1449, %v1501, 0.0
        %1503 = vadd.xlane.f32.xlu0 %v1502
        %v1504 = vpop.xlane.xlu0 %1503
        %v1505 = vrcp.pop %v1504
        %v1506 = vmul.f32 %v1501, %v1505
        %v1507 = vadd.f32 %v1506, 0.0
        %v1508 = vpack.c.bf16 %v1506, %v1506
        %v1510 = vsel %vm1449, %v1508, 0
        %vm1512 = vcmask 1043456
        %v1514 = vsel %vm1512, %v1448, 0
        %1516 = vmatprep.subr.bf16.mxu0 0
        %1517 = vmatpush1.bf16.msra.mxu0 %v1514
        %1518 = vmatprep.subr.bf16.mxu0 0
        %1519 = vmatpush1.bf16.msra.mxu0 0
        %1520 = vmatprep.subr.bf16.mxu0 0
        %1521 = vmatpush1.bf16.msra.mxu0 0
        %1522 = vmatprep.subr.bf16.mxu0 0
        %1523 = vmatpush1.bf16.msra.mxu0 0
        %1524 = vmatprep.subr.bf16.mxu0 0
        %1525 = vmatpush1.bf16.msra.mxu0 0
        %1526 = vmatprep.subr.bf16.mxu0 0
        %1527 = vmatpush1.bf16.msra.mxu0 0
        %1528 = vmatprep.subr.bf16.mxu0 0
        %1529 = vmatpush1.bf16.msra.mxu0 0
        %1530 = vmatprep.subr.bf16.mxu0 0
        %1531 = vmatpush1.bf16.msra.mxu0 0
        %1532 = vmatprep.subr.bf16.mxu0 0
        %1533 = vmatpush1.bf16.msra.mxu0 0
        %1534 = vmatprep.subr.bf16.mxu0 0
        %1535 = vmatpush1.bf16.msra.mxu0 0
        %1536 = vmatprep.subr.bf16.mxu0 0
        %1537 = vmatpush1.bf16.msra.mxu0 0
        %1538 = vmatprep.subr.bf16.mxu0 0
        %1539 = vmatpush1.bf16.msra.mxu0 0
        %1540 = vmatprep.subr.bf16.mxu0 0
        %1541 = vmatpush1.bf16.msra.mxu0 0
        %1542 = vmatprep.subr.bf16.mxu0 0
        %1543 = vmatpush1.bf16.msra.mxu0 0
        %1544 = vmatprep.subr.bf16.mxu0 0
        %1545 = vmatpush1.bf16.msra.mxu0 0
        %1546 = vmatprep.subr.bf16.mxu0 0
        %1547 = vmatpush1.bf16.msra.mxu0 0
        %1548 = vmatprep.mubr.bf16.mxu0 0
        %1549 = vmatmul.mubr.bf16.gmra.mrb[0].mxu0 %v1510
        %v1550 = vpop.f32.mrb[0].mxu0
        %v1551 = vadd.f32 0.0, %v1550
        %v1552 = vpop.f32.mrb[0].mxu0
        %v1553 = vpop.f32.mrb[0].mxu0
        %v1554 = vpop.f32.mrb[0].mxu0
        %1555 = vdwg.mxu0
        %1557 = vrot.lane.b32.xlu0 %v1446, 120
        %v1558 = vpop.permute.xlu0 %1557
        %1560 = vrot.lane.b32.xlu0 %v1447, 120
        %v1561 = vpop.permute.xlu0 %1560
        %v1563 = vsel %vm1449, %v1558, 0
        %v1566 = vsel %vm1449, %v1561, 0
        %1568 = vmatprep.subr.bf16.mxu0 0
        %1569 = vmatpush1.bf16.xpose.msra.mxu0 %v1566
        %1570 = vmatprep.subr.bf16.mxu0 0
        %1571 = vmatpush1.bf16.xpose.msra.mxu0 0
        %1572 = vmatprep.subr.bf16.mxu0 0
        %1573 = vmatpush1.bf16.xpose.msra.mxu0 0
        %1574 = vmatprep.subr.bf16.mxu0 0
        %1575 = vmatpush1.bf16.xpose.msra.mxu0 0
        %1576 = vmatprep.subr.bf16.mxu0 0
        %1577 = vmatpush1.bf16.xpose.msra.mxu0 0
        %1578 = vmatprep.subr.bf16.mxu0 0
        %1579 = vmatpush1.bf16.xpose.msra.mxu0 0
        %1580 = vmatprep.subr.bf16.mxu0 0
        %1581 = vmatpush1.bf16.xpose.msra.mxu0 0
        %1582 = vmatprep.subr.bf16.mxu0 0
        %1583 = vmatpush1.bf16.xpose.msra.mxu0 0
        %1584 = vmatprep.subr.bf16.mxu0 0
        %1585 = vmatpush1.bf16.xpose.msra.mxu0 0
        %1586 = vmatprep.subr.bf16.mxu0 0
        %1587 = vmatpush1.bf16.xpose.msra.mxu0 0
        %1588 = vmatprep.subr.bf16.mxu0 0
        %1589 = vmatpush1.bf16.xpose.msra.mxu0 0
        %1590 = vmatprep.subr.bf16.mxu0 0
        %1591 = vmatpush1.bf16.xpose.msra.mxu0 0
        %1592 = vmatprep.subr.bf16.mxu0 0
        %1593 = vmatpush1.bf16.xpose.msra.mxu0 0
        %1594 = vmatprep.subr.bf16.mxu0 0
        %1595 = vmatpush1.bf16.xpose.msra.mxu0 0
        %1596 = vmatprep.subr.bf16.mxu0 0
        %1597 = vmatpush1.bf16.xpose.msra.mxu0 0
        %1598 = vmatprep.subr.bf16.mxu0 0
        %1599 = vmatpush1.bf16.xpose.msra.mxu0 0
        %1600 = vmatprep.mubr.bf16.mxu0 0
        %1601 = vmatmul.mubr.bf16.gmra.mrb[0].mxu0 %v1563
        %v1602 = vpop.f32.mrb[0].mxu0
        %v1603 = vadd.f32 0.0, %v1602
        %v1604 = vpop.f32.mrb[0].mxu0
        %v1605 = vpop.f32.mrb[0].mxu0
        %v1606 = vpop.f32.mrb[0].mxu0
        %1607 = vdwg.mxu0
        %v1608 = vsel %vm1449, %v1603, -inf
        %1609 = vmax.xlane.f32.xlu0 %v1608
        %v1610 = vpop.xlane.xlu0 %1609
        %v1611 = vsub.f32 %v1603, %v1610
        %v1612 = vmul.f32 %v1611, 1.442695
        %v1613 = vpow.pop %v1612
        %v1614 = vsel %vm1449, %v1613, 0.0
        %1615 = vadd.xlane.f32.xlu0 %v1614
        %v1616 = vpop.xlane.xlu0 %1615
        %v1617 = vrcp.pop %v1616
        %v1618 = vmul.f32 %v1613, %v1617
        %v1619 = vadd.f32 %v1507, %v1618
        %v1620 = vpack.c.bf16 %v1618, %v1618
        %1622 = vrot.lane.b32.xlu0 %v1448, 120
        %v1623 = vpop.permute.xlu0 %1622
        %v1625 = vsel %vm1449, %v1620, 0
        %v1628 = vsel %vm1512, %v1623, 0
        %1630 = vmatprep.subr.bf16.mxu0 0
        %1631 = vmatpush1.bf16.msra.mxu0 %v1628
        %1632 = vmatprep.subr.bf16.mxu0 0
        %1633 = vmatpush1.bf16.msra.mxu0 0
        %1634 = vmatprep.subr.bf16.mxu0 0
        %1635 = vmatpush1.bf16.msra.mxu0 0
        %1636 = vmatprep.subr.bf16.mxu0 0
        %1637 = vmatpush1.bf16.msra.mxu0 0
        %1638 = vmatprep.subr.bf16.mxu0 0
        %1639 = vmatpush1.bf16.msra.mxu0 0
        %1640 = vmatprep.subr.bf16.mxu0 0
        %1641 = vmatpush1.bf16.msra.mxu0 0
        %1642 = vmatprep.subr.bf16.mxu0 0
        %1643 = vmatpush1.bf16.msra.mxu0 0
        %1644 = vmatprep.subr.bf16.mxu0 0
        %1645 = vmatpush1.bf16.msra.mxu0 0
        %1646 = vmatprep.subr.bf16.mxu0 0
        %1647 = vmatpush1.bf16.msra.mxu0 0
        %1648 = vmatprep.subr.bf16.mxu0 0
        %1649 = vmatpush1.bf16.msra.mxu0 0
        %1650 = vmatprep.subr.bf16.mxu0 0
        %1651 = vmatpush1.bf16.msra.mxu0 0
        %1652 = vmatprep.subr.bf16.mxu0 0
        %1653 = vmatpush1.bf16.msra.mxu0 0
        %1654 = vmatprep.subr.bf16.mxu0 0
        %1655 = vmatpush1.bf16.msra.mxu0 0
        %1656 = vmatprep.subr.bf16.mxu0 0
        %1657 = vmatpush1.bf16.msra.mxu0 0
        %1658 = vmatprep.subr.bf16.mxu0 0
        %1659 = vmatpush1.bf16.msra.mxu0 0
        %1660 = vmatprep.subr.bf16.mxu0 0
        %1661 = vmatpush1.bf16.msra.mxu0 0
        %1662 = vmatprep.mubr.bf16.mxu0 0
        %1663 = vmatmul.mubr.bf16.gmra.mrb[0].mxu0 %v1625
        %v1664 = vpop.f32.mrb[0].mxu0
        %v1665 = vadd.f32 0.0, %v1664
        %v1666 = vpop.f32.mrb[0].mxu0
        %v1667 = vpop.f32.mrb[0].mxu0
        %v1668 = vpop.f32.mrb[0].mxu0
        %1669 = vdwg.mxu0
        %1670 = vrot.lane.b32.xlu0 %v1446, 112
        %v1671 = vpop.permute.xlu0 %1670
        %1672 = vrot.lane.b32.xlu0 %v1447, 112
        %v1673 = vpop.permute.xlu0 %1672
        %v1675 = vsel %vm1449, %v1671, 0
        %v1678 = vsel %vm1449, %v1673, 0
        %1680 = vmatprep.subr.bf16.mxu0 0
        %1681 = vmatpush1.bf16.xpose.msra.mxu0 %v1678
        %1682 = vmatprep.subr.bf16.mxu0 0
        %1683 = vmatpush1.bf16.xpose.msra.mxu0 0
        %1684 = vmatprep.subr.bf16.mxu0 0
        %1685 = vmatpush1.bf16.xpose.msra.mxu0 0
        %1686 = vmatprep.subr.bf16.mxu0 0
        %1687 = vmatpush1.bf16.xpose.msra.mxu0 0
        %1688 = vmatprep.subr.bf16.mxu0 0
        %1689 = vmatpush1.bf16.xpose.msra.mxu0 0
        %1690 = vmatprep.subr.bf16.mxu0 0
        %1691 = vmatpush1.bf16.xpose.msra.mxu0 0
        %1692 = vmatprep.subr.bf16.mxu0 0
        %1693 = vmatpush1.bf16.xpose.msra.mxu0 0
        %1694 = vmatprep.subr.bf16.mxu0 0
        %1695 = vmatpush1.bf16.xpose.msra.mxu0 0
        %1696 = vmatprep.subr.bf16.mxu0 0
        %1697 = vmatpush1.bf16.xpose.msra.mxu0 0
        %1698 = vmatprep.subr.bf16.mxu0 0
        %1699 = vmatpush1.bf16.xpose.msra.mxu0 0
        %1700 = vmatprep.subr.bf16.mxu0 0
        %1701 = vmatpush1.bf16.xpose.msra.mxu0 0
        %1702 = vmatprep.subr.bf16.mxu0 0
        %1703 = vmatpush1.bf16.xpose.msra.mxu0 0
        %1704 = vmatprep.subr.bf16.mxu0 0
        %1705 = vmatpush1.bf16.xpose.msra.mxu0 0
        %1706 = vmatprep.subr.bf16.mxu0 0
        %1707 = vmatpush1.bf16.xpose.msra.mxu0 0
        %1708 = vmatprep.subr.bf16.mxu0 0
        %1709 = vmatpush1.bf16.xpose.msra.mxu0 0
        %1710 = vmatprep.subr.bf16.mxu0 0
        %1711 = vmatpush1.bf16.xpose.msra.mxu0 0
        %1712 = vmatprep.mubr.bf16.mxu0 0
        %1713 = vmatmul.mubr.bf16.gmra.mrb[0].mxu0 %v1675
        %v1714 = vpop.f32.mrb[0].mxu0
        %v1715 = vadd.f32 0.0, %v1714
        %v1716 = vpop.f32.mrb[0].mxu0
        %v1717 = vpop.f32.mrb[0].mxu0
        %v1718 = vpop.f32.mrb[0].mxu0
        %1719 = vdwg.mxu0
        %v1720 = vsel %vm1449, %v1715, -inf
        %1721 = vmax.xlane.f32.xlu0 %v1720
        %v1722 = vpop.xlane.xlu0 %1721
        %v1723 = vsub.f32 %v1715, %v1722
        %v1724 = vmul.f32 %v1723, 1.442695
        %v1725 = vpow.pop %v1724
        %v1726 = vsel %vm1449, %v1725, 0.0
        %1727 = vadd.xlane.f32.xlu0 %v1726
        %v1728 = vpop.xlane.xlu0 %1727
        %v1729 = vrcp.pop %v1728
        %v1730 = vmul.f32 %v1725, %v1729
        %v1731 = vadd.f32 %v1619, %v1730
        %v1732 = vpack.c.bf16 %v1730, %v1730
        %1733 = vrot.lane.b32.xlu0 %v1448, 112
        %v1734 = vpop.permute.xlu0 %1733
        %v1736 = vsel %vm1449, %v1732, 0
        %v1739 = vsel %vm1512, %v1734, 0
        %1741 = vmatprep.subr.bf16.mxu0 0
        %1742 = vmatpush1.bf16.msra.mxu0 %v1739
        %1743 = vmatprep.subr.bf16.mxu0 0
        %1744 = vmatpush1.bf16.msra.mxu0 0
        %1745 = vmatprep.subr.bf16.mxu0 0
        %1746 = vmatpush1.bf16.msra.mxu0 0
        %1747 = vmatprep.subr.bf16.mxu0 0
        %1748 = vmatpush1.bf16.msra.mxu0 0
        %1749 = vmatprep.subr.bf16.mxu0 0
        %1750 = vmatpush1.bf16.msra.mxu0 0
        %1751 = vmatprep.subr.bf16.mxu0 0
        %1752 = vmatpush1.bf16.msra.mxu0 0
        %1753 = vmatprep.subr.bf16.mxu0 0
        %1754 = vmatpush1.bf16.msra.mxu0 0
        %1755 = vmatprep.subr.bf16.mxu0 0
        %1756 = vmatpush1.bf16.msra.mxu0 0
        %1757 = vmatprep.subr.bf16.mxu0 0
        %1758 = vmatpush1.bf16.msra.mxu0 0
        %1759 = vmatprep.subr.bf16.mxu0 0
        %1760 = vmatpush1.bf16.msra.mxu0 0
        %1761 = vmatprep.subr.bf16.mxu0 0
        %1762 = vmatpush1.bf16.msra.mxu0 0
        %1763 = vmatprep.subr.bf16.mxu0 0
        %1764 = vmatpush1.bf16.msra.mxu0 0
        %1765 = vmatprep.subr.bf16.mxu0 0
        %1766 = vmatpush1.bf16.msra.mxu0 0
        %1767 = vmatprep.subr.bf16.mxu0 0
        %1768 = vmatpush1.bf16.msra.mxu0 0
        %1769 = vmatprep.subr.bf16.mxu0 0
        %1770 = vmatpush1.bf16.msra.mxu0 0
        %1771 = vmatprep.subr.bf16.mxu0 0
        %1772 = vmatpush1.bf16.msra.mxu0 0
        %1773 = vmatprep.mubr.bf16.mxu0 0
        %1774 = vmatmul.mubr.bf16.gmra.mrb[0].mxu0 %v1736
        %v1775 = vpop.f32.mrb[0].mxu0
        %v1776 = vadd.f32 0.0, %v1775
        %v1777 = vpop.f32.mrb[0].mxu0
        %v1778 = vpop.f32.mrb[0].mxu0
        %v1779 = vpop.f32.mrb[0].mxu0
        %1780 = vdwg.mxu0
        %1781 = vrot.lane.b32.xlu0 %v1446, 104
        %v1782 = vpop.permute.xlu0 %1781
        %1783 = vrot.lane.b32.xlu0 %v1447, 104
        %v1784 = vpop.permute.xlu0 %1783
        %v1786 = vsel %vm1449, %v1782, 0
        %v1789 = vsel %vm1449, %v1784, 0
        %1791 = vmatprep.subr.bf16.mxu0 0
        %1792 = vmatpush1.bf16.xpose.msra.mxu0 %v1789
        %1793 = vmatprep.subr.bf16.mxu0 0
        %1794 = vmatpush1.bf16.xpose.msra.mxu0 0
        %1795 = vmatprep.subr.bf16.mxu0 0
        %1796 = vmatpush1.bf16.xpose.msra.mxu0 0
        %1797 = vmatprep.subr.bf16.mxu0 0
        %1798 = vmatpush1.bf16.xpose.msra.mxu0 0
        %1799 = vmatprep.subr.bf16.mxu0 0
        %1800 = vmatpush1.bf16.xpose.msra.mxu0 0
        %1801 = vmatprep.subr.bf16.mxu0 0
        %1802 = vmatpush1.bf16.xpose.msra.mxu0 0
        %1803 = vmatprep.subr.bf16.mxu0 0
        %1804 = vmatpush1.bf16.xpose.msra.mxu0 0
        %1805 = vmatprep.subr.bf16.mxu0 0
        %1806 = vmatpush1.bf16.xpose.msra.mxu0 0
        %1807 = vmatprep.subr.bf16.mxu0 0
        %1808 = vmatpush1.bf16.xpose.msra.mxu0 0
        %1809 = vmatprep.subr.bf16.mxu0 0
        %1810 = vmatpush1.bf16.xpose.msra.mxu0 0
        %1811 = vmatprep.subr.bf16.mxu0 0
        %1812 = vmatpush1.bf16.xpose.msra.mxu0 0
        %1813 = vmatprep.subr.bf16.mxu0 0
        %1814 = vmatpush1.bf16.xpose.msra.mxu0 0
        %1815 = vmatprep.subr.bf16.mxu0 0
        %1816 = vmatpush1.bf16.xpose.msra.mxu0 0
        %1817 = vmatprep.subr.bf16.mxu0 0
        %1818 = vmatpush1.bf16.xpose.msra.mxu0 0
        %1819 = vmatprep.subr.bf16.mxu0 0
        %1820 = vmatpush1.bf16.xpose.msra.mxu0 0
        %1821 = vmatprep.subr.bf16.mxu0 0
        %1822 = vmatpush1.bf16.xpose.msra.mxu0 0
        %1823 = vmatprep.mubr.bf16.mxu0 0
        %1824 = vmatmul.mubr.bf16.gmra.mrb[0].mxu0 %v1786
        %v1825 = vpop.f32.mrb[0].mxu0
        %v1826 = vadd.f32 0.0, %v1825
        %v1827 = vpop.f32.mrb[0].mxu0
        %v1828 = vpop.f32.mrb[0].mxu0
        %v1829 = vpop.f32.mrb[0].mxu0
        %1830 = vdwg.mxu0
        %v1831 = vsel %vm1449, %v1826, -inf
        %1832 = vmax.xlane.f32.xlu0 %v1831
        %v1833 = vpop.xlane.xlu0 %1832
        %v1834 = vsub.f32 %v1826, %v1833
        %v1835 = vmul.f32 %v1834, 1.442695
        %v1836 = vpow.pop %v1835
        %v1837 = vsel %vm1449, %v1836, 0.0
        %1838 = vadd.xlane.f32.xlu0 %v1837
        %v1839 = vpop.xlane.xlu0 %1838
        %v1840 = vrcp.pop %v1839
        %v1841 = vmul.f32 %v1836, %v1840
        %v1842 = vadd.f32 %v1731, %v1841
        %v1843 = vpack.c.bf16 %v1841, %v1841
        %1844 = vrot.lane.b32.xlu0 %v1448, 104
        %v1845 = vpop.permute.xlu0 %1844
        %v1847 = vsel %vm1449, %v1843, 0
        %v1850 = vsel %vm1512, %v1845, 0
        %1852 = vmatprep.subr.bf16.mxu0 0
        %1853 = vmatpush1.bf16.msra.mxu0 %v1850
        %1854 = vmatprep.subr.bf16.mxu0 0
        %1855 = vmatpush1.bf16.msra.mxu0 0
        %1856 = vmatprep.subr.bf16.mxu0 0
        %1857 = vmatpush1.bf16.msra.mxu0 0
        %1858 = vmatprep.subr.bf16.mxu0 0
        %1859 = vmatpush1.bf16.msra.mxu0 0
        %1860 = vmatprep.subr.bf16.mxu0 0
        %1861 = vmatpush1.bf16.msra.mxu0 0
        %1862 = vmatprep.subr.bf16.mxu0 0
        %1863 = vmatpush1.bf16.msra.mxu0 0
        %1864 = vmatprep.subr.bf16.mxu0 0
        %1865 = vmatpush1.bf16.msra.mxu0 0
        %1866 = vmatprep.subr.bf16.mxu0 0
        %1867 = vmatpush1.bf16.msra.mxu0 0
        %1868 = vmatprep.subr.bf16.mxu0 0
        %1869 = vmatpush1.bf16.msra.mxu0 0
        %1870 = vmatprep.subr.bf16.mxu0 0
        %1871 = vmatpush1.bf16.msra.mxu0 0
        %1872 = vmatprep.subr.bf16.mxu0 0
        %1873 = vmatpush1.bf16.msra.mxu0 0
        %1874 = vmatprep.subr.bf16.mxu0 0
        %1875 = vmatpush1.bf16.msra.mxu0 0
        %1876 = vmatprep.subr.bf16.mxu0 0
        %1877 = vmatpush1.bf16.msra.mxu0 0
        %1878 = vmatprep.subr.bf16.mxu0 0
        %1879 = vmatpush1.bf16.msra.mxu0 0
        %1880 = vmatprep.subr.bf16.mxu0 0
        %1881 = vmatpush1.bf16.msra.mxu0 0
        %1882 = vmatprep.subr.bf16.mxu0 0
        %1883 = vmatpush1.bf16.msra.mxu0 0
        %1884 = vmatprep.mubr.bf16.mxu0 0
        %1885 = vmatmul.mubr.bf16.gmra.mrb[0].mxu0 %v1847
        %v1886 = vpop.f32.mrb[0].mxu0
        %v1887 = vadd.f32 0.0, %v1886
        %v1888 = vpop.f32.mrb[0].mxu0
        %v1889 = vpop.f32.mrb[0].mxu0
        %v1890 = vpop.f32.mrb[0].mxu0
        %1891 = vdwg.mxu0
        %v1892 = vmul.f32 %v1842, 0.25
        %1893 = vst.msk [vmem:[%s1235] sm:$0xff] %vm1449, %v1892
        %1895 = vrot.lane.b32.xlu0 %v1665, 8
        %v1896 = vpop.permute.xlu0 %1895
        %1899 = vrot.lane.b32.xlu0 %v1776, 16
        %v1900 = vpop.permute.xlu0 %1899
        %1903 = vrot.lane.b32.xlu0 %v1887, 24
        %v1904 = vpop.permute.xlu0 %1903
        %v1906 = vsel %vm1449, %v1551, %v1896
        %vm1907 = vcmask 130048
        %v1908 = vsel %vm1907, %v1906, %v1900
        %vm1909 = vcmask 195584
        %v1910 = vsel %vm1909, %v1908, %v1904
        %v1911 = vpack.c.bf16 %v1910, %v1910
        %v1912 = vld [vmem:[%s1027] sm:$0xf]
        %v1913 = vld [vmem:[%s1027 + $0x4] sm:$0xf]
        %v1914 = vld [vmem:[%s1027 + $0x8] sm:$0xf]
        %v1915 = vld [vmem:[%s1027 + $0xc] sm:$0xf]
        %v1916 = vld [vmem:[%s1035] sm:$0x1]
        %v1918 = vlaneseq
        %v1919 = vshrl.u32 %v1918, 7
        %v1920 = vsub.s32 0, %v1919
        %v1921 = vrot.slane %v1916, %v1920
        %v1927 = vunpack.c.l.b16 %v1912
        %v1928 = vunpack.c.l.b16 %v1913
        %v1929 = vunpack.c.l.b16 %v1914
        %v1930 = vunpack.c.l.b16 %v1915
        %v1931 = vpack.c.b16 %v1928, %v1927
        %v1932 = vpack.c.b16 %v1930, %v1929
        %v1936 = vsel %vm1273, %v1911, 0
        %1938 = vmatprep.subr.bf16.mxu0 0
        %1939 = vmatpush1.bf16.msra.mxu0 %v1931
        %1940 = vmatprep.subr.bf16.mxu0 0
        %1941 = vmatpush1.bf16.msra.mxu0 %v1932
        %1942 = vmatprep.subr.bf16.mxu0 0
        %1943 = vmatpush1.bf16.msra.mxu0 0
        %1944 = vmatprep.subr.bf16.mxu0 0
        %1945 = vmatpush1.bf16.msra.mxu0 0
        %1946 = vmatprep.subr.bf16.mxu0 0
        %1947 = vmatpush1.bf16.msra.mxu0 0
        %1948 = vmatprep.subr.bf16.mxu0 0
        %1949 = vmatpush1.bf16.msra.mxu0 0
        %1950 = vmatprep.subr.bf16.mxu0 0
        %1951 = vmatpush1.bf16.msra.mxu0 0
        %1952 = vmatprep.subr.bf16.mxu0 0
        %1953 = vmatpush1.bf16.msra.mxu0 0
        %1954 = vmatprep.subr.bf16.mxu0 0
        %1955 = vmatpush1.bf16.msra.mxu0 0
        %1956 = vmatprep.subr.bf16.mxu0 0
        %1957 = vmatpush1.bf16.msra.mxu0 0
        %1958 = vmatprep.subr.bf16.mxu0 0
        %1959 = vmatpush1.bf16.msra.mxu0 0
        %1960 = vmatprep.subr.bf16.mxu0 0
        %1961 = vmatpush1.bf16.msra.mxu0 0
        %1962 = vmatprep.subr.bf16.mxu0 0
        %1963 = vmatpush1.bf16.msra.mxu0 0
        %1964 = vmatprep.subr.bf16.mxu0 0
        %1965 = vmatpush1.bf16.msra.mxu0 0
        %1966 = vmatprep.subr.bf16.mxu0 0
        %1967 = vmatpush1.bf16.msra.mxu0 0
        %1968 = vmatprep.subr.bf16.mxu0 0
        %1969 = vmatpush1.bf16.msra.mxu0 0
        %1970 = vmatprep.mubr.bf16.mxu0 0
        %1971 = vmatmul.mubr.bf16.gmra.mrb[0].mxu0 %v1936
        %v1972 = vpop.f32.mrb[0].mxu0
        %v1973 = vadd.f32 %v1921, %v1972
        %v1974 = vpop.f32.mrb[0].mxu0
        %v1975 = vpop.f32.mrb[0].mxu0
        %v1976 = vpop.f32.mrb[0].mxu0
        %1977 = vdwg.mxu0
        %v1978 = vadd.f32 %v1244, %v1973
        %v1979 = vld [vmem:[%s1043] sm:$0x1]
        %v1980 = vld [vmem:[%s1051] sm:$0x1]
        %v1981 = vsel %vm1273, %v1978, 0.0
        %1982 = vadd.xlane.f32.xlu0 %v1981
        %v1983 = vpop.xlane.xlu0 %1982
        %v1984 = vrcp.pop 32.0
        %v1985 = vmul.f32 %v1983, %v1984
        %v1986 = vsub.f32 %v1978, %v1985
        %v1987 = vmul.f32 %v1986, %v1986
        %v1988 = vsel %vm1273, %v1987, 0.0
        %1989 = vadd.xlane.f32.xlu0 %v1988
        %v1990 = vpop.xlane.xlu0 %1989
        %v1991 = vmul.f32 %v1990, %v1984
        %v1992 = vadd.f32 %v1991, 1e-05
        %v1993 = vrsqrt.pop %v1992
        %v1994 = vmul.f32 %v1986, %v1993
        %v1996 = vlaneseq
        %v1997 = vshrl.u32 %v1996, 7
        %v1998 = vsub.s32 0, %v1997
        %v1999 = vrot.slane %v1979, %v1998
        %v2001 = vmul.f32 %v1994, %v1999
        %v2003 = vlaneseq
        %v2004 = vshrl.u32 %v2003, 7
        %v2005 = vsub.s32 0, %v2004
        %v2006 = vrot.slane %v1980, %v2005
        %v2008 = vadd.f32 %v2001, %v2006
        %v2009 = vpack.c.bf16 %v2008, %v2008
        %v2010 = vld [vmem:[%s1060] sm:$0xf]
        %v2011 = vld [vmem:[%s1060 + $0x4] sm:$0xf]
        %v2012 = vld [vmem:[%s1060 + $0x8] sm:$0xf]
        %v2013 = vld [vmem:[%s1060 + $0xc] sm:$0xf]
        %v2014 = vld [vmem:[%s1068] sm:$0x1]
        %v2016 = vlaneseq
        %v2017 = vshrl.u32 %v2016, 7
        %v2018 = vsub.s32 0, %v2017
        %v2019 = vrot.slane %v2014, %v2018
        %v2025 = vunpack.c.l.b16 %v2010
        %v2026 = vunpack.c.l.b16 %v2011
        %v2027 = vunpack.c.l.b16 %v2012
        %v2028 = vunpack.c.l.b16 %v2013
        %v2029 = vpack.c.b16 %v2026, %v2025
        %v2030 = vpack.c.b16 %v2028, %v2027
        %v2034 = vsel %vm1273, %v2009, 0
        %2036 = vmatprep.subr.bf16.mxu0 0
        %2037 = vmatpush1.bf16.msra.mxu0 %v2029
        %2038 = vmatprep.subr.bf16.mxu0 0
        %2039 = vmatpush1.bf16.msra.mxu0 %v2030
        %2040 = vmatprep.subr.bf16.mxu0 0
        %2041 = vmatpush1.bf16.msra.mxu0 0
        %2042 = vmatprep.subr.bf16.mxu0 0
        %2043 = vmatpush1.bf16.msra.mxu0 0
        %2044 = vmatprep.subr.bf16.mxu0 0
        %2045 = vmatpush1.bf16.msra.mxu0 0
        %2046 = vmatprep.subr.bf16.mxu0 0
        %2047 = vmatpush1.bf16.msra.mxu0 0
        %2048 = vmatprep.subr.bf16.mxu0 0
        %2049 = vmatpush1.bf16.msra.mxu0 0
        %2050 = vmatprep.subr.bf16.mxu0 0
        %2051 = vmatpush1.bf16.msra.mxu0 0
        %2052 = vmatprep.subr.bf16.mxu0 0
        %2053 = vmatpush1.bf16.msra.mxu0 0
        %2054 = vmatprep.subr.bf16.mxu0 0
        %2055 = vmatpush1.bf16.msra.mxu0 0
        %2056 = vmatprep.subr.bf16.mxu0 0
        %2057 = vmatpush1.bf16.msra.mxu0 0
        %2058 = vmatprep.subr.bf16.mxu0 0
        %2059 = vmatpush1.bf16.msra.mxu0 0
        %2060 = vmatprep.subr.bf16.mxu0 0
        %2061 = vmatpush1.bf16.msra.mxu0 0
        %2062 = vmatprep.subr.bf16.mxu0 0
        %2063 = vmatpush1.bf16.msra.mxu0 0
        %2064 = vmatprep.subr.bf16.mxu0 0
        %2065 = vmatpush1.bf16.msra.mxu0 0
        %2066 = vmatprep.subr.bf16.mxu0 0
        %2067 = vmatpush1.bf16.msra.mxu0 0
        %2068 = vmatprep.mubr.bf16.mxu0 0
        %2069 = vmatmul.mubr.bf16.gmra.mrb[0].mxu0 %v2034
        %v2070 = vpop.f32.mrb[0].mxu0
        %v2071 = vadd.f32 %v2019, %v2070
        %v2072 = vpop.f32.mrb[0].mxu0
        %v2073 = vpop.f32.mrb[0].mxu0
        %v2074 = vpop.f32.mrb[0].mxu0
        %2075 = vdwg.mxu0
        %v2076 = vmax.f32 %v2071, 0.0
        %v2077 = vpack.c.bf16 %v2076, %v2076
        %v2078 = vld [vmem:[%s1077] sm:$0xf]
        %v2079 = vld [vmem:[%s1077 + $0x4] sm:$0xf]
        %v2080 = vld [vmem:[%s1077 + $0x8] sm:$0xf]
        %v2081 = vld [vmem:[%s1077 + $0xc] sm:$0xf]
        %v2082 = vld [vmem:[%s1077 + $0x10] sm:$0xf]
        %v2083 = vld [vmem:[%s1077 + $0x14] sm:$0xf]
        %v2084 = vld [vmem:[%s1077 + $0x18] sm:$0xf]
        %v2085 = vld [vmem:[%s1077 + $0x1c] sm:$0xf]
        %v2086 = vld [vmem:[%s1085] sm:$0x1]
        %v2088 = vlaneseq
        %v2089 = vshrl.u32 %v2088, 7
        %v2090 = vsub.s32 0, %v2089
        %v2091 = vrot.slane %v2086, %v2090
        %v2101 = vunpack.c.l.b16 %v2078
        %v2102 = vunpack.c.l.b16 %v2079
        %v2103 = vunpack.c.l.b16 %v2080
        %v2104 = vunpack.c.l.b16 %v2081
        %v2105 = vunpack.c.l.b16 %v2082
        %v2106 = vunpack.c.l.b16 %v2083
        %v2107 = vunpack.c.l.b16 %v2084
        %v2108 = vunpack.c.l.b16 %v2085
        %v2109 = vpack.c.b16 %v2102, %v2101
        %v2110 = vpack.c.b16 %v2104, %v2103
        %v2111 = vpack.c.b16 %v2106, %v2105
        %v2112 = vpack.c.b16 %v2108, %v2107
        %vm2117 = vcmask 523264
        %v2119 = vsel %vm2117, %v2077, 0
        %2121 = vmatprep.subr.bf16.mxu0 0
        %2122 = vmatpush1.bf16.msra.mxu0 %v2109
        %2123 = vmatprep.subr.bf16.mxu0 0
        %2124 = vmatpush1.bf16.msra.mxu0 %v2110
        %2125 = vmatprep.subr.bf16.mxu0 0
        %2126 = vmatpush1.bf16.msra.mxu0 %v2111
        %2127 = vmatprep.subr.bf16.mxu0 0
        %2128 = vmatpush1.bf16.msra.mxu0 %v2112
        %2129 = vmatprep.subr.bf16.mxu0 0
        %2130 = vmatpush1.bf16.msra.mxu0 0
        %2131 = vmatprep.subr.bf16.mxu0 0
        %2132 = vmatpush1.bf16.msra.mxu0 0
        %2133 = vmatprep.subr.bf16.mxu0 0
        %2134 = vmatpush1.bf16.msra.mxu0 0
        %2135 = vmatprep.subr.bf16.mxu0 0
        %2136 = vmatpush1.bf16.msra.mxu0 0
        %2137 = vmatprep.subr.bf16.mxu0 0
        %2138 = vmatpush1.bf16.msra.mxu0 0
        %2139 = vmatprep.subr.bf16.mxu0 0
        %2140 = vmatpush1.bf16.msra.mxu0 0
        %2141 = vmatprep.subr.bf16.mxu0 0
        %2142 = vmatpush1.bf16.msra.mxu0 0
        %2143 = vmatprep.subr.bf16.mxu0 0
        %2144 = vmatpush1.bf16.msra.mxu0 0
        %2145 = vmatprep.subr.bf16.mxu0 0
        %2146 = vmatpush1.bf16.msra.mxu0 0
        %2147 = vmatprep.subr.bf16.mxu0 0
        %2148 = vmatpush1.bf16.msra.mxu0 0
        %2149 = vmatprep.subr.bf16.mxu0 0
        %2150 = vmatpush1.bf16.msra.mxu0 0
        %2151 = vmatprep.subr.bf16.mxu0 0
        %2152 = vmatpush1.bf16.msra.mxu0 0
        %2153 = vmatprep.mubr.bf16.mxu0 0
        %2154 = vmatmul.mubr.bf16.gmra.mrb[0].mxu0 %v2119
        %v2155 = vpop.f32.mrb[0].mxu0
        %v2156 = vadd.f32 %v2091, %v2155
        %v2157 = vpop.f32.mrb[0].mxu0
        %v2158 = vpop.f32.mrb[0].mxu0
        %v2159 = vpop.f32.mrb[0].mxu0
        %2160 = vdwg.mxu0
        %v2161 = vadd.f32 %v2008, %v2156
        %v2162 = vld [vmem:[%s1093] sm:$0x1]
        %v2163 = vld [vmem:[%s1101] sm:$0x1]
        %v2164 = vsel %vm1273, %v2161, 0.0
        %2165 = vadd.xlane.f32.xlu0 %v2164
        %v2166 = vpop.xlane.xlu0 %2165
        %v2167 = vmul.f32 %v2166, %v1984
        %v2168 = vsub.f32 %v2161, %v2167
        %v2169 = vmul.f32 %v2168, %v2168
        %v2170 = vsel %vm1273, %v2169, 0.0
        %2171 = vadd.xlane.f32.xlu0 %v2170
        %v2172 = vpop.xlane.xlu0 %2171
        %v2173 = vmul.f32 %v2172, %v1984
        %v2174 = vadd.f32 %v2173, 1e-05
        %v2175 = vrsqrt.pop %v2174
        %v2176 = vmul.f32 %v2168, %v2175
        %v2178 = vlaneseq
        %v2179 = vshrl.u32 %v2178, 7
        %v2180 = vsub.s32 0, %v2179
        %v2181 = vrot.slane %v2162, %v2180
        %v2183 = vmul.f32 %v2176, %v2181
        %v2185 = vlaneseq
        %v2186 = vshrl.u32 %v2185, 7
        %v2187 = vsub.s32 0, %v2186
        %v2188 = vrot.slane %v2163, %v2187
        %v2190 = vadd.f32 %v2183, %v2188
        %2191 = vst.msk [vmem:[%s1228] sm:$0xff] %vm1273, %v2190
        %s2192 = sand.u32 %s555, 1
        %s2193 = scalar_lea.sflag [#allocation4], %s2192
        %s2194 = sand.u32 %s555, 1
        %s2195 = smul.addr %s2194, 8
        %s2196 = scalar_lea.vmem [#allocation31], %s2195
        %s2197 = sand.u32 %s583, 1
        %s2198 = scalar_lea.sflag [#allocation33], %s2197
        %s2199 = sand.u32 %s583, 1
        %s2200 = smul.addr %s2199, 8
        %s2201 = scalar_lea.vmem [#allocation32], %s2200
        // Predicated region
        $region169: #{tpu_custom_call.1} parent=91 // pred_check
          %p2202 = pneg %p565
        $region170: #{tpu_custom_call.1} parent=91 // pred_check_branch
          %2204 = sbr.rel (%p2202) target = $region172
        $region171: #{tpu_custom_call.1} parent=91 // pred_region
          %s2206 = ssub.s32 128, 128
          %2207 = vsyncadd %s2193, %s2206
          %s2208 = smul.addr %s71, 128
          %s2209 = scalar_lea.hbm %s18, %s2208
          %s2211 = sshll.u32 %s2196, 4
          %s2212 = int_to_ptr.vmem [resolvable:$true] %s2211
          %2214 = dma.vmem_to_hbm [thread:$0]  %s2212, 128, %s2209, %s2193
        $region172: #{tpu_custom_call.1} parent=91 // pred_fallthru
          _
        // Predicated region
        $region173: #{tpu_custom_call.1} parent=91 // pred_check
          %p2215 = pneg %p593
        $region174: #{tpu_custom_call.1} parent=91 // pred_check_branch
          %2217 = sbr.rel (%p2215) target = $region176
        $region175: #{tpu_custom_call.1} parent=91 // pred_region
          %s2219 = ssub.s32 128, 128
          %2220 = vsyncadd %s2198, %s2219
          %s2221 = smul.addr %s72, 2
          %s2222 = sadd.s32 %s71, %s2221
          %s2223 = smul.addr %s2222, 128
          %s2224 = scalar_lea.hbm %s19, %s2223
          %s2226 = sshll.u32 %s2201, 4
          %s2227 = int_to_ptr.vmem [resolvable:$true] %s2226
          %2229 = dma.vmem_to_hbm [thread:$0]  %s2227, 128, %s2224, %s2198
        $region176: #{tpu_custom_call.1} parent=91 // pred_fallthru
          _
      $region92: #{tpu_custom_call.1} parent=5 // pred_fallthru
        _
      %p2230 = scmp.le.s32.totalorder 2, %s62
      // Predicated region
      $region177: #{tpu_custom_call.1} parent=5 // pred_check
        %p2231 = pneg %p2230
      $region178: #{tpu_custom_call.1} parent=5 // pred_check_branch
        %2233 = sbr.rel (%p2231) target = $region180
      $region179: #{tpu_custom_call.1} parent=5 // pred_region
        %s2234 = ssub.s32 %s62, 2
        // Predicated region
        $region181: #{tpu_custom_call.1} parent=179 // pred_check
          %p2235 = pneg %p571
        $region182: #{tpu_custom_call.1} parent=179 // pred_check_branch
          %2237 = sbr.rel (%p2235) target = $region184
        $region183: #{tpu_custom_call.1} parent=179 // pred_region
          %s2238 = sand.u32 %s556, 1
          %s2239 = scalar_lea.sflag [#allocation4], %s2238
          %s2240 = sand.u32 %s556, 1
          %s2241 = smul.addr %s2240, 8
          %s2242 = scalar_lea.vmem [#allocation31], %s2241
          %2243 = dma.done %s2239, 128
        $region184: #{tpu_custom_call.1} parent=179 // pred_fallthru
          _
        // Predicated region
        $region185: #{tpu_custom_call.1} parent=179 // pred_check
          %p2244 = pneg %p599
        $region186: #{tpu_custom_call.1} parent=179 // pred_check_branch
          %2246 = sbr.rel (%p2244) target = $region188
        $region187: #{tpu_custom_call.1} parent=179 // pred_region
          %s2247 = sand.u32 %s584, 1
          %s2248 = scalar_lea.sflag [#allocation33], %s2247
          %s2249 = sand.u32 %s584, 1
          %s2250 = smul.addr %s2249, 8
          %s2251 = scalar_lea.vmem [#allocation32], %s2250
          %2252 = dma.done %s2248, 128
        $region188: #{tpu_custom_call.1} parent=179 // pred_fallthru
          _
      $region180: #{tpu_custom_call.1} parent=5 // pred_fallthru
        _
    $region6: #{tpu_custom_call.1} parent=1 // loop_footer
      %s66 = sadd.s32 1, %s62
    $region7: #{tpu_custom_call.1} parent=1 // loop_footer_branch
      %61 = sbr.rel target = $region3
    $region8: #{tpu_custom_call.1} parent=1 // loop_exit
      _
    %2253 = vsyncpa [#allocation3], 1
    %s2254 = scalar_lea.sflag [#allocation3], 1
    %2255 = vsyncpa %s2254, 1
    %2256 = vsyncpa [#allocation6], 1
    %s2257 = scalar_lea.sflag [#allocation6], 1
    %2258 = vsyncpa %s2257, 1
    %2259 = vsyncpa [#allocation9], 1
    %s2260 = scalar_lea.sflag [#allocation9], 1
    %2261 = vsyncpa %s2260, 1
    %2262 = vsyncpa [#allocation12], 1
    %s2263 = scalar_lea.sflag [#allocation12], 1
    %2264 = vsyncpa %s2263, 1
    %2265 = vsyncpa [#allocation15], 1
    %s2266 = scalar_lea.sflag [#allocation15], 1
    %2267 = vsyncpa %s2266, 1
    %2268 = vsyncpa [#allocation18], 1
    %s2269 = scalar_lea.sflag [#allocation18], 1
    %2270 = vsyncpa %s2269, 1
    %2271 = vsyncpa [#allocation21], 1
    %s2272 = scalar_lea.sflag [#allocation21], 1
    %2273 = vsyncpa %s2272, 1
    %2274 = vsyncpa [#allocation24], 1
    %s2275 = scalar_lea.sflag [#allocation24], 1
    %2276 = vsyncpa %s2275, 1
    %2277 = vsyncpa [#allocation27], 1
    %s2278 = scalar_lea.sflag [#allocation27], 1
    %2279 = vsyncpa %s2278, 1
    %2280 = vsyncpa [#allocation30], 1
    %s2281 = scalar_lea.sflag [#allocation30], 1
    %2282 = vsyncpa %s2281, 1
    %2283 = vsyncpa [#allocation4], 1
    %s2284 = scalar_lea.sflag [#allocation4], 1
    %2285 = vsyncpa %s2284, 1
    %2286 = vsyncpa [#allocation33], 1
    %s2287 = scalar_lea.sflag [#allocation33], 1
    %2288 = vsyncpa %s2287, 1

</llo_original>
